<compile_context>
chip_gen: v5e
topology: v5e:2x2
jax: 0.10.0
libtpu: 0.0.40
codegen_flags: <defaults>
</compile_context>

<pallas_src>
import functools

import jax
import jax.numpy as jnp
from jax import lax
from jax.experimental import pallas as pl
from jax.experimental.pallas import tpu as pltpu


def excelformer_kernel(x_ref, gamma_ref, beta_ref, wq_ref, wk_ref, wv_ref,
                       wout_ref, bout_ref, wglu_ref, mask_ref, o_ref, *,
                       heads, dim_head, scale):
    Bt, N, D = x_ref.shape
    R = Bt * N

    x = x_ref[...].reshape(R, D).astype(jnp.float32)          # (R, D)

    # --- LayerNorm (eps=1e-5, biased variance, torch.nn.LayerNorm semantics) --
    mean = jnp.mean(x, axis=-1, keepdims=True)
    xc = x - mean
    var = jnp.mean(xc * xc, axis=-1, keepdims=True)
    xn = xc * lax.rsqrt(var + 1e-5) * gamma_ref[...] + beta_ref[...]

    # --- QKV projection, heads-batched: q/k/v are (heads, R, dim_head) --------
    xnh = jnp.broadcast_to(xn[None], (heads, R, D))
    nn = (((2,), (1,)), ((0,), (0,)))          # canonical batched "NN" matmul
    nt = (((2,), (2,)), ((0,), (0,)))          # canonical batched "NT" matmul
    q = lax.dot_general(xnh, wq_ref[...], nn, preferred_element_type=jnp.float32)
    k = lax.dot_general(xnh, wk_ref[...], nn, preferred_element_type=jnp.float32)
    v = lax.dot_general(xnh, wv_ref[...], nn, preferred_element_type=jnp.float32)

    # --- Semi-permeable attention, all heads in one batched dot_general chain -
    sim = lax.dot_general(q, k, nt, preferred_element_type=jnp.float32)  # (h,R,R)
    logits = (sim + mask_ref[...]) * scale     # mask: 0 allowed, -10000 otherwise
    logits = logits - jnp.max(logits, axis=-1, keepdims=True)
    p = jnp.exp(logits)
    attn = p / jnp.sum(p, axis=-1, keepdims=True)
    # dropout is identity in eval mode
    out = lax.dot_general(attn, v, nn, preferred_element_type=jnp.float32)  # (h,R,dh)

    # --- Output projection with the head-merge folded in: sum_h out_h @ Wout_h
    proj = lax.dot_general(out, wout_ref[...], nn,
                           preferred_element_type=jnp.float32)              # (h,R,D)
    attn_out = jnp.sum(proj, axis=0) + bout_ref[...]                        # (R, D)

    # --- GLU + residual --------------------------------------------------------
    g = jnp.dot(attn_out, wglu_ref[...], preferred_element_type=jnp.float32)  # (R,2D)
    a, gates = g[:, :D], g[:, D:]
    y = attn_out + a * jnp.tanh(gates)
    o_ref[...] = y.reshape(Bt, N, D).astype(o_ref.dtype)


def excelformer_conv(x, gamma, beta, wqkv, wout, bout, wglu, *, heads, dim_head,
                     batch_tile=None):
    B, N, D = x.shape
    inner = heads * dim_head
    scale = dim_head ** (-0.5)

    Bt = B if batch_tile is None else batch_tile
    assert B % Bt == 0, "batch must be divisible by batch_tile"
    R = Bt * N

    # Wrapper-side (free, XLA) weight re-layouts: heads becomes a leading batch
    # dim so the kernel never has to shuffle lanes to split / merge heads.
    wq, wk, wv = jnp.split(wqkv, 3, axis=1)                       # (D, inner) each

    def _heads_first(w):                                          # -> (heads, D, dh)
        return jnp.transpose(w.reshape(D, heads, dim_head), (1, 0, 2))

    wq_h, wk_h, wv_h = _heads_first(wq), _heads_first(wk), _heads_first(wv)
    wout_h = wout.reshape(heads, dim_head, D)                     # (heads, dh, D)

    # Additive mask over the fused Bt*N rows: allowed iff same sample AND
    # col <= row (semi-permeable); everything else gets -10000 (as in the ref).
    r = jnp.arange(R)
    allowed = ((r[None, :] // N) == (r[:, None] // N)) & (r[None, :] <= r[:, None])
    mask_add = jnp.where(allowed, 0.0, -10000.0).astype(jnp.float32)

    kernel = functools.partial(excelformer_kernel, heads=heads,
                               dim_head=dim_head, scale=scale)

    def _const(shape):
        n = len(shape)
        return pl.BlockSpec(shape, lambda b, _n=n: (0,) * _n)

    return pl.pallas_call(
        kernel,
        out_shape=jax.ShapeDtypeStruct((B, N, D), x.dtype),
        grid=(B // Bt,),
        in_specs=[
            pl.BlockSpec((Bt, N, D), lambda b: (b, 0, 0)),        # x
            _const((1, D)),                                       # layernorm gamma
            _const((1, D)),                                       # layernorm beta
            _const((heads, D, dim_head)),                         # W_q (heads-first)
            _const((heads, D, dim_head)),                         # W_k
            _const((heads, D, dim_head)),                         # W_v
            _const((heads, dim_head, D)),                         # W_out (heads-first)
            _const((1, D)),                                       # b_out
            _const((D, 2 * D)),                                   # W_glu
            _const((R, R)),                                       # additive mask
        ],
        out_specs=pl.BlockSpec((Bt, N, D), lambda b: (b, 0, 0)),
        compiler_params=pltpu.CompilerParams(
            dimension_semantics=("parallel",)),
    )(x, gamma.reshape(1, D), beta.reshape(1, D), wq_h, wk_h, wv_h,
      wout_h, bout.reshape(1, D), wglu, mask_add)


def excelformer_reference(x, gamma, beta, wqkv, wout, bout, wglu, *, heads, dim_head):
    """Pure-JAX reference mirroring the PyTorch forward."""
    B, N, D = x.shape
    inner = heads * dim_head
    scale = dim_head ** (-0.5)

    mean = x.mean(-1, keepdims=True)
    var = ((x - mean) ** 2).mean(-1, keepdims=True)
    xn = (x - mean) / jnp.sqrt(var + 1e-5) * gamma + beta

    qkv = xn @ wqkv
    q, k, v = jnp.split(qkv, 3, axis=-1)

    def rearr(t):
        return t.reshape(B, N, heads, dim_head).transpose(0, 2, 1, 3)

    q, k, v = rearr(q), rearr(k), rearr(v)
    sim = jnp.einsum('bhid,bhjd->bhij', q, k)
    ids = jnp.arange(N)
    allowed = (ids[None, :] <= ids[:, None]).astype(jnp.float32)
    mask = (1.0 - allowed) * -10000.0
    attn = jax.nn.softmax((sim + mask) * scale, axis=-1)
    out = jnp.einsum('bhij,bhjd->bhid', attn, v)
    out = out.transpose(0, 2, 1, 3).reshape(B, N, inner)
    attn_out = out @ wout + bout
    g = attn_out @ wglu
    a, gates = g[..., :D], g[..., D:]
    return attn_out + a * jnp.tanh(gates)


if __name__ == "__main__":
    B, N, D = 2, 8, 32          # batch, num_cols (tokens), feature dim
    heads, dim_head = 8, 16
    inner = heads * dim_head

    key = jax.random.PRNGKey(0)
    kx, k1, k2, k3, k4 = jax.random.split(key, 5)

    x = jax.random.normal(kx, (B, N, D), dtype=jnp.float32)

    gamma = jnp.ones((D,), jnp.float32)
    beta = jnp.zeros((D,), jnp.float32)
    wqkv = jax.random.normal(k1, (D, 3 * inner), jnp.float32) * 0.05
    wout = jax.random.normal(k2, (inner, D), jnp.float32) * 0.05
    bout = jax.random.normal(k3, (D,), jnp.float32) * 0.05
    wglu = jax.random.normal(k4, (D, 2 * D), jnp.float32) * 0.05

    out = excelformer_conv(x, gamma, beta, wqkv, wout, bout, wglu,
                           heads=heads, dim_head=dim_head)
    out = jax.block_until_ready(out)

    ref = excelformer_reference(x, gamma, beta, wqkv, wout, bout, wglu,
                                heads=heads, dim_head=dim_head)
    assert out.shape == (B, N, D)
    assert jnp.allclose(out, ref, atol=1e-4, rtol=1e-4)

    print("KERNEL_OK")
</pallas_src>

<mosaic_0001>
module attributes {stable_mosaic.version = 11 : i64} {
  func.func @excelformer_kernel(%arg0: i32, %arg1: memref<2x8x32xf32, #tpu.memory_space<vmem>>, %arg2: memref<1x32xf32, #tpu.memory_space<vmem>>, %arg3: memref<1x32xf32, #tpu.memory_space<vmem>>, %arg4: memref<8x32x16xf32, #tpu.memory_space<vmem>>, %arg5: memref<8x32x16xf32, #tpu.memory_space<vmem>>, %arg6: memref<8x32x16xf32, #tpu.memory_space<vmem>>, %arg7: memref<8x16x32xf32, #tpu.memory_space<vmem>>, %arg8: memref<1x32xf32, #tpu.memory_space<vmem>>, %arg9: memref<32x64xf32, #tpu.memory_space<vmem>>, %arg10: memref<16x16xf32, #tpu.memory_space<vmem>>, %arg11: memref<2x8x32xf32, #tpu.memory_space<vmem>>) attributes {dimension_semantics = [#tpu.dimension_semantics<parallel>], iteration_bounds = array<i64: 1>, scalar_prefetch = 0 : i64, scratch_operands = 0 : i64, tpu.core_type = #tpu.core_type<tc>, window_params = [{transform_indices = @transform_0, window_bounds = array<i64: 2, 8, 32>}, {pipeline_mode = #tpu.pipeline_mode<synchronous>, transform_indices = @transform_1, window_bounds = array<i64: 1, 32>}, {pipeline_mode = #tpu.pipeline_mode<synchronous>, transform_indices = @transform_2, window_bounds = array<i64: 1, 32>}, {pipeline_mode = #tpu.pipeline_mode<synchronous>, transform_indices = @transform_3, window_bounds = array<i64: 8, 32, 16>}, {pipeline_mode = #tpu.pipeline_mode<synchronous>, transform_indices = @transform_4, window_bounds = array<i64: 8, 32, 16>}, {pipeline_mode = #tpu.pipeline_mode<synchronous>, transform_indices = @transform_5, window_bounds = array<i64: 8, 32, 16>}, {pipeline_mode = #tpu.pipeline_mode<synchronous>, transform_indices = @transform_6, window_bounds = array<i64: 8, 16, 32>}, {pipeline_mode = #tpu.pipeline_mode<synchronous>, transform_indices = @transform_7, window_bounds = array<i64: 1, 32>}, {pipeline_mode = #tpu.pipeline_mode<synchronous>, transform_indices = @transform_8, window_bounds = array<i64: 32, 64>}, {pipeline_mode = #tpu.pipeline_mode<synchronous>, transform_indices = @transform_9, window_bounds = array<i64: 16, 16>}, {transform_indices = @transform_10, window_bounds = array<i64: 2, 8, 32>}]} {
    %c0 = arith.constant 0 : index
    %c0_0 = arith.constant 0 : index
    %c0_1 = arith.constant 0 : index
    %0 = vector.load %arg1[%c0, %c0_0, %c0_1] : memref<2x8x32xf32, #tpu.memory_space<vmem>>, vector<2x8x32xf32>
    %1 = vector.shape_cast %0 : vector<2x8x32xf32> to vector<16x32xf32>
    %cst = arith.constant dense<0.000000e+00> : vector<16xf32>
    %2 = vector.multi_reduction <add>, %1, %cst [1] : vector<16x32xf32> to vector<16xf32>
    %3 = vector.shape_cast %2 : vector<16xf32> to vector<16x1xf32>
    %cst_2 = arith.constant 3.200000e+01 : f32
    %4 = vector.broadcast %cst_2 : f32 to vector<16x1xf32>
    %5 = arith.divf %3, %4 : vector<16x1xf32>
    %6 = vector.broadcast %5 : vector<16x1xf32> to vector<16x32xf32>
    %7 = arith.subf %1, %6 : vector<16x32xf32>
    %8 = arith.mulf %7, %7 : vector<16x32xf32>
    %cst_3 = arith.constant dense<0.000000e+00> : vector<16xf32>
    %9 = vector.multi_reduction <add>, %8, %cst_3 [1] : vector<16x32xf32> to vector<16xf32>
    %10 = vector.shape_cast %9 : vector<16xf32> to vector<16x1xf32>
    %cst_4 = arith.constant 3.200000e+01 : f32
    %11 = vector.broadcast %cst_4 : f32 to vector<16x1xf32>
    %12 = arith.divf %10, %11 : vector<16x1xf32>
    %cst_5 = arith.constant 9.99999974E-6 : f32
    %13 = vector.broadcast %cst_5 : f32 to vector<16x1xf32>
    %14 = arith.addf %12, %13 : vector<16x1xf32>
    %15 = math.rsqrt %14 : vector<16x1xf32>
    %16 = vector.broadcast %15 : vector<16x1xf32> to vector<16x32xf32>
    %17 = arith.mulf %7, %16 : vector<16x32xf32>
    %c0_6 = arith.constant 0 : index
    %c0_7 = arith.constant 0 : index
    %18 = vector.load %arg2[%c0_6, %c0_7] : memref<1x32xf32, #tpu.memory_space<vmem>>, vector<1x32xf32>
    %19 = vector.broadcast %18 : vector<1x32xf32> to vector<16x32xf32>
    %20 = arith.mulf %17, %19 : vector<16x32xf32>
    %c0_8 = arith.constant 0 : index
    %c0_9 = arith.constant 0 : index
    %21 = vector.load %arg3[%c0_8, %c0_9] : memref<1x32xf32, #tpu.memory_space<vmem>>, vector<1x32xf32>
    %22 = vector.broadcast %21 : vector<1x32xf32> to vector<16x32xf32>
    %23 = arith.addf %20, %22 : vector<16x32xf32>
    %24 = vector.shape_cast %23 : vector<16x32xf32> to vector<1x16x32xf32>
    %25 = vector.shape_cast %24 : vector<1x16x32xf32> to vector<1x16x32xf32>
    %26 = vector.broadcast %25 : vector<1x16x32xf32> to vector<8x16x32xf32>
    %c0_10 = arith.constant 0 : index
    %c0_11 = arith.constant 0 : index
    %c0_12 = arith.constant 0 : index
    %27 = vector.load %arg4[%c0_10, %c0_11, %c0_12] : memref<8x32x16xf32, #tpu.memory_space<vmem>>, vector<8x32x16xf32>
    %cst_13 = arith.constant dense<0.000000e+00> : vector<8x16x16xf32>
    %28 = tpu.matmul %26, %27, %cst_13 {dimension_numbers = #tpu.dot_dimension_numbers<[2], [1], [1], [2], [0, 0, 0, 1, 1, 2], [0], [0]>} : vector<8x16x32xf32>, vector<8x32x16xf32>, vector<8x16x16xf32> -> vector<8x16x16xf32>
    %c0_14 = arith.constant 0 : index
    %c0_15 = arith.constant 0 : index
    %c0_16 = arith.constant 0 : index
    %29 = vector.load %arg5[%c0_14, %c0_15, %c0_16] : memref<8x32x16xf32, #tpu.memory_space<vmem>>, vector<8x32x16xf32>
    %cst_17 = arith.constant dense<0.000000e+00> : vector<8x16x16xf32>
    %30 = tpu.matmul %26, %29, %cst_17 {dimension_numbers = #tpu.dot_dimension_numbers<[2], [1], [1], [2], [0, 0, 0, 1, 1, 2], [0], [0]>} : vector<8x16x32xf32>, vector<8x32x16xf32>, vector<8x16x16xf32> -> vector<8x16x16xf32>
    %c0_18 = arith.constant 0 : index
    %c0_19 = arith.constant 0 : index
    %c0_20 = arith.constant 0 : index
    %31 = vector.load %arg6[%c0_18, %c0_19, %c0_20] : memref<8x32x16xf32, #tpu.memory_space<vmem>>, vector<8x32x16xf32>
    %cst_21 = arith.constant dense<0.000000e+00> : vector<8x16x16xf32>
    %32 = tpu.matmul %26, %31, %cst_21 {dimension_numbers = #tpu.dot_dimension_numbers<[2], [1], [1], [2], [0, 0, 0, 1, 1, 2], [0], [0]>} : vector<8x16x32xf32>, vector<8x32x16xf32>, vector<8x16x16xf32> -> vector<8x16x16xf32>
    %cst_22 = arith.constant dense<0.000000e+00> : vector<8x16x16xf32>
    %33 = tpu.matmul %28, %30, %cst_22 {dimension_numbers = #tpu.dot_dimension_numbers<[2], [2], [1], [1], [0, 0, 0, 1, 1, 1], [0], [0]>} : vector<8x16x16xf32>, vector<8x16x16xf32>, vector<8x16x16xf32> -> vector<8x16x16xf32>
    %c0_23 = arith.constant 0 : index
    %c0_24 = arith.constant 0 : index
    %34 = vector.load %arg10[%c0_23, %c0_24] : memref<16x16xf32, #tpu.memory_space<vmem>>, vector<16x16xf32>
    %35 = vector.shape_cast %34 : vector<16x16xf32> to vector<1x16x16xf32>
    %36 = vector.broadcast %35 : vector<1x16x16xf32> to vector<8x16x16xf32>
    %37 = arith.addf %33, %36 : vector<8x16x16xf32>
    %cst_25 = arith.constant 2.500000e-01 : f32
    %38 = vector.broadcast %cst_25 : f32 to vector<8x16x16xf32>
    %39 = arith.mulf %37, %38 : vector<8x16x16xf32>
    %cst_26 = arith.constant dense<0xFF800000> : vector<8x16xf32>
    %40 = vector.multi_reduction <maximumf>, %39, %cst_26 [2] : vector<8x16x16xf32> to vector<8x16xf32>
    %41 = vector.shape_cast %40 : vector<8x16xf32> to vector<8x16x1xf32>
    %42 = vector.broadcast %41 : vector<8x16x1xf32> to vector<8x16x16xf32>
    %43 = arith.subf %39, %42 : vector<8x16x16xf32>
    %44 = math.exp %43 : vector<8x16x16xf32>
    %cst_27 = arith.constant dense<0.000000e+00> : vector<8x16xf32>
    %45 = vector.multi_reduction <add>, %44, %cst_27 [2] : vector<8x16x16xf32> to vector<8x16xf32>
    %46 = vector.shape_cast %45 : vector<8x16xf32> to vector<8x16x1xf32>
    %47 = vector.broadcast %46 : vector<8x16x1xf32> to vector<8x16x16xf32>
    %48 = arith.divf %44, %47 : vector<8x16x16xf32>
    %cst_28 = arith.constant dense<0.000000e+00> : vector<8x16x16xf32>
    %49 = tpu.matmul %48, %32, %cst_28 {dimension_numbers = #tpu.dot_dimension_numbers<[2], [1], [1], [2], [0, 0, 0, 1, 1, 2], [0], [0]>} : vector<8x16x16xf32>, vector<8x16x16xf32>, vector<8x16x16xf32> -> vector<8x16x16xf32>
    %c0_29 = arith.constant 0 : index
    %c0_30 = arith.constant 0 : index
    %c0_31 = arith.constant 0 : index
    %50 = vector.load %arg7[%c0_29, %c0_30, %c0_31] : memref<8x16x32xf32, #tpu.memory_space<vmem>>, vector<8x16x32xf32>
    %cst_32 = arith.constant dense<0.000000e+00> : vector<8x16x32xf32>
    %51 = tpu.matmul %49, %50, %cst_32 {dimension_numbers = #tpu.dot_dimension_numbers<[2], [1], [1], [2], [0, 0, 0, 1, 1, 2], [0], [0]>} : vector<8x16x16xf32>, vector<8x16x32xf32>, vector<8x16x32xf32> -> vector<8x16x32xf32>
    %cst_33 = arith.constant dense<0.000000e+00> : vector<16x32xf32>
    %52 = vector.multi_reduction <add>, %51, %cst_33 [0] : vector<8x16x32xf32> to vector<16x32xf32>
    %c0_34 = arith.constant 0 : index
    %c0_35 = arith.constant 0 : index
    %53 = vector.load %arg8[%c0_34, %c0_35] : memref<1x32xf32, #tpu.memory_space<vmem>>, vector<1x32xf32>
    %54 = vector.broadcast %53 : vector<1x32xf32> to vector<16x32xf32>
    %55 = arith.addf %52, %54 : vector<16x32xf32>
    %c0_36 = arith.constant 0 : index
    %c0_37 = arith.constant 0 : index
    %56 = vector.load %arg9[%c0_36, %c0_37] : memref<32x64xf32, #tpu.memory_space<vmem>>, vector<32x64xf32>
    %cst_38 = arith.constant dense<0.000000e+00> : vector<16x64xf32>
    %57 = tpu.matmul %55, %56, %cst_38 {dimension_numbers = #tpu.dot_dimension_numbers<[1], [0], [0], [1], [0, 0, 1, 1], [], []>} : vector<16x32xf32>, vector<32x64xf32>, vector<16x64xf32> -> vector<16x64xf32>
    %58 = vector.extract_strided_slice %57 {offsets = [0, 0], sizes = [16, 32], strides = [1, 1]} : vector<16x64xf32> to vector<16x32xf32>
    %59 = vector.extract_strided_slice %57 {offsets = [0, 32], sizes = [16, 32], strides = [1, 1]} : vector<16x64xf32> to vector<16x32xf32>
    %60 = math.tanh %59 : vector<16x32xf32>
    %61 = arith.mulf %58, %60 : vector<16x32xf32>
    %62 = arith.addf %55, %61 : vector<16x32xf32>
    %63 = vector.shape_cast %62 : vector<16x32xf32> to vector<2x8x32xf32>
    %c0_39 = arith.constant 0 : index
    %c0_40 = arith.constant 0 : index
    %c0_41 = arith.constant 0 : index
    %64 = vector.load %arg11[%c0_39, %c0_40, %c0_41] : memref<2x8x32xf32, #tpu.memory_space<vmem>>, vector<2x8x32xf32>
    tpu.vector_store %arg11[%c0_39, %c0_40, %c0_41], %63 {strides = array<i32>} : memref<2x8x32xf32, #tpu.memory_space<vmem>>, vector<2x8x32xf32>,
    return
  }
  func.func @transform_0(%arg0: i32) -> (i32, i32, i32) {
    %c0_i32 = arith.constant 0 : i32
    %c0_i32_0 = arith.constant 0 : i32
    %c0_i32_1 = arith.constant 0 : i32
    return %arg0, %c0_i32, %c0_i32_0 : i32, i32, i32
  }
  func.func @transform_1(%arg0: i32) -> (i32, i32) {
    %c0_i32 = arith.constant 0 : i32
    %c0_i32_0 = arith.constant 0 : i32
    %c0_i32_1 = arith.constant 0 : i32
    return %c0_i32, %c0_i32_0 : i32, i32
  }
  func.func @transform_2(%arg0: i32) -> (i32, i32) {
    %c0_i32 = arith.constant 0 : i32
    %c0_i32_0 = arith.constant 0 : i32
    %c0_i32_1 = arith.constant 0 : i32
    return %c0_i32, %c0_i32_0 : i32, i32
  }
  func.func @transform_3(%arg0: i32) -> (i32, i32, i32) {
    %c0_i32 = arith.constant 0 : i32
    %c0_i32_0 = arith.constant 0 : i32
    %c0_i32_1 = arith.constant 0 : i32
    %c0_i32_2 = arith.constant 0 : i32
    return %c0_i32, %c0_i32_0, %c0_i32_1 : i32, i32, i32
  }
  func.func @transform_4(%arg0: i32) -> (i32, i32, i32) {
    %c0_i32 = arith.constant 0 : i32
    %c0_i32_0 = arith.constant 0 : i32
    %c0_i32_1 = arith.constant 0 : i32
    %c0_i32_2 = arith.constant 0 : i32
    return %c0_i32, %c0_i32_0, %c0_i32_1 : i32, i32, i32
  }
  func.func @transform_5(%arg0: i32) -> (i32, i32, i32) {
    %c0_i32 = arith.constant 0 : i32
    %c0_i32_0 = arith.constant 0 : i32
    %c0_i32_1 = arith.constant 0 : i32
    %c0_i32_2 = arith.constant 0 : i32
    return %c0_i32, %c0_i32_0, %c0_i32_1 : i32, i32, i32
  }
  func.func @transform_6(%arg0: i32) -> (i32, i32, i32) {
    %c0_i32 = arith.constant 0 : i32
    %c0_i32_0 = arith.constant 0 : i32
    %c0_i32_1 = arith.constant 0 : i32
    %c0_i32_2 = arith.constant 0 : i32
    return %c0_i32, %c0_i32_0, %c0_i32_1 : i32, i32, i32
  }
  func.func @transform_7(%arg0: i32) -> (i32, i32) {
    %c0_i32 = arith.constant 0 : i32
    %c0_i32_0 = arith.constant 0 : i32
    %c0_i32_1 = arith.constant 0 : i32
    return %c0_i32, %c0_i32_0 : i32, i32
  }
  func.func @transform_8(%arg0: i32) -> (i32, i32) {
    %c0_i32 = arith.constant 0 : i32
    %c0_i32_0 = arith.constant 0 : i32
    %c0_i32_1 = arith.constant 0 : i32
    return %c0_i32, %c0_i32_0 : i32, i32
  }
  func.func @transform_9(%arg0: i32) -> (i32, i32) {
    %c0_i32 = arith.constant 0 : i32
    %c0_i32_0 = arith.constant 0 : i32
    %c0_i32_1 = arith.constant 0 : i32
    return %c0_i32, %c0_i32_0 : i32, i32
  }
  func.func @transform_10(%arg0: i32) -> (i32, i32, i32) {
    %c0_i32 = arith.constant 0 : i32
    %c0_i32_0 = arith.constant 0 : i32
    %c0_i32_1 = arith.constant 0 : i32
    return %arg0, %c0_i32, %c0_i32_0 : i32, i32, i32
  }
}

</mosaic_0001>

<llo_original>
// kernel: tpu_custom_call.1
$region0: #{tpu_custom_call.1}
  #allocation0 [shape = 'u32[]', space=smem, size = 0x4, offset = 0x4, fixed_abs, tag = 'smem constant byte address 0x4 - core index']
  #allocation1 [shape = 'u32[72,128]{1,0:T(1,128)}', space=vmem, size = 0x9000, scoped, tag = 'internal scratch']
  %s0 = inlined_call_operand.vmem [shape: f32[2,8,32], index: 0, kind: input, shape index: {}]
  %s1 = inlined_call_operand.vmem [shape: f32[1,32], index: 1, kind: input, shape index: {}]
  %s2 = inlined_call_operand.vmem [shape: f32[1,32], index: 2, kind: input, shape index: {}]
  %s3 = inlined_call_operand.vmem [shape: f32[8,32,16], index: 3, kind: input, shape index: {}]
  %s4 = inlined_call_operand.vmem [shape: f32[8,32,16], index: 4, kind: input, shape index: {}]
  %s5 = inlined_call_operand.vmem [shape: f32[8,32,16], index: 5, kind: input, shape index: {}]
  %s6 = inlined_call_operand.vmem [shape: f32[8,16,32], index: 6, kind: input, shape index: {}]
  %s7 = inlined_call_operand.vmem [shape: f32[1,32], index: 7, kind: input, shape index: {}]
  %s8 = inlined_call_operand.vmem [shape: f32[32,64], index: 8, kind: input, shape index: {}]
  %s9 = inlined_call_operand.vmem [shape: f32[16,16], index: 9, kind: input, shape index: {}]
  %s10 = inlined_call_operand.hbm [shape: f32[2,8,32], index: 10, kind: output, shape index: {}]
  %s11 = sld [smem:[#allocation0]]
  $region50: #{tpu_custom_call.1} parent=0
    _
  %s13 = ssub.s32 1, %s11
  %s14 = scalar_select 0, %s13, %s11
  $region1: #{tpu_custom_call.1} parent=0
    #allocation2 [shape = 'u8[8192]{0}', space=vmem, size = 0x2000, scoped, tag = 'output window, operand 0, single buffered']
    #allocation3 [shape = 's32[1]{0}', space=sflag, size = 0x4, scoped, tag = 'scoped memory for tpu_custom_call.1']
    %15 = vsyncpa [#allocation3], 0
    // Predicated region
    $region2: #{tpu_custom_call.1} parent=1 // pred_check
      _
    $region3: #{tpu_custom_call.1} parent=1 // pred_check_branch
      %17 = sbr.rel (0) target = $region5
    $region4: #{tpu_custom_call.1} parent=1 // pred_region
      _
    $region5: #{tpu_custom_call.1} parent=1 // pred_fallthru
      _
    // Predicated region
    $region6: #{tpu_custom_call.1} parent=1 // pred_check
      _
    $region7: #{tpu_custom_call.1} parent=1 // pred_check_branch
      %19 = sbr.rel (0) target = $region9
    $region8: #{tpu_custom_call.1} parent=1 // pred_region
      _
    $region9: #{tpu_custom_call.1} parent=1 // pred_fallthru
      _
    // Predicated region
    $region10: #{tpu_custom_call.1} parent=1 // pred_check
      _
    $region11: #{tpu_custom_call.1} parent=1 // pred_check_branch
      %21 = sbr.rel (0) target = $region13
    $region12: #{tpu_custom_call.1} parent=1 // pred_region
      _
    $region13: #{tpu_custom_call.1} parent=1 // pred_fallthru
      _
    // Predicated region
    $region14: #{tpu_custom_call.1} parent=1 // pred_check
      _
    $region15: #{tpu_custom_call.1} parent=1 // pred_check_branch
      %23 = sbr.rel (0) target = $region17
    $region16: #{tpu_custom_call.1} parent=1 // pred_region
      _
    $region17: #{tpu_custom_call.1} parent=1 // pred_fallthru
      _
    // Predicated region
    $region18: #{tpu_custom_call.1} parent=1 // pred_check
      _
    $region19: #{tpu_custom_call.1} parent=1 // pred_check_branch
      %25 = sbr.rel (0) target = $region21
    $region20: #{tpu_custom_call.1} parent=1 // pred_region
      _
    $region21: #{tpu_custom_call.1} parent=1 // pred_fallthru
      _
    // Predicated region
    $region22: #{tpu_custom_call.1} parent=1 // pred_check
      _
    $region23: #{tpu_custom_call.1} parent=1 // pred_check_branch
      %27 = sbr.rel (0) target = $region25
    $region24: #{tpu_custom_call.1} parent=1 // pred_region
      _
    $region25: #{tpu_custom_call.1} parent=1 // pred_fallthru
      _
    // Predicated region
    $region26: #{tpu_custom_call.1} parent=1 // pred_check
      _
    $region27: #{tpu_custom_call.1} parent=1 // pred_check_branch
      %29 = sbr.rel (0) target = $region29
    $region28: #{tpu_custom_call.1} parent=1 // pred_region
      _
    $region29: #{tpu_custom_call.1} parent=1 // pred_fallthru
      _
    // Predicated region
    $region30: #{tpu_custom_call.1} parent=1 // pred_check
      _
    $region31: #{tpu_custom_call.1} parent=1 // pred_check_branch
      %31 = sbr.rel (0) target = $region33
    $region32: #{tpu_custom_call.1} parent=1 // pred_region
      _
    $region33: #{tpu_custom_call.1} parent=1 // pred_fallthru
      _
    // Predicated region
    $region34: #{tpu_custom_call.1} parent=1 // pred_check
      _
    $region35: #{tpu_custom_call.1} parent=1 // pred_check_branch
      %33 = sbr.rel (0) target = $region37
    $region36: #{tpu_custom_call.1} parent=1 // pred_region
      _
    $region37: #{tpu_custom_call.1} parent=1 // pred_fallthru
      _
    // Predicated region
    $region38: #{tpu_custom_call.1} parent=1 // pred_check
      _
    $region39: #{tpu_custom_call.1} parent=1 // pred_check_branch
      %35 = sbr.rel (0) target = $region41
    $region40: #{tpu_custom_call.1} parent=1 // pred_region
      _
    $region41: #{tpu_custom_call.1} parent=1 // pred_fallthru
      _
    %v36 = vld [vmem:[%s0] sm:$0xff]
    %v37 = vld [vmem:[%s0 + $0x8] sm:$0xff]
    %vm38 = vcmask 261120
    %v39 = vsel %vm38, %v36, 0.0
    %40 = vadd.xlane.f32.xlu0 %v39
    %v41 = vpop.xlane.xlu0 %40
    %v42 = vsel %vm38, %v37, 0.0
    %43 = vadd.xlane.f32.xlu0 %v42
    %v44 = vpop.xlane.xlu0 %43
    %v45 = vrcp.pop 32.0
    %v46 = vmul.f32 32.0, %v45
    %v47 = vsub.f32 1.0, %v46
    %v48 = vmul.f32 %v45, %v47
    %v49 = vadd.f32 %v45, %v48
    %vm50 = vweird.f32 %v45
    %v51 = vsel %vm50, %v45, %v49
    %v52 = vmul.f32 %v41, %v51
    %v53 = vmul.f32 %v44, %v51
    %v54 = vsub.f32 %v36, %v52
    %v55 = vsub.f32 %v37, %v53
    %v56 = vmul.f32 %v54, %v54
    %v57 = vmul.f32 %v55, %v55
    %v58 = vsel %vm38, %v56, 0.0
    %59 = vadd.xlane.f32.xlu0 %v58
    %v60 = vpop.xlane.xlu0 %59
    %v61 = vsel %vm38, %v57, 0.0
    %62 = vadd.xlane.f32.xlu0 %v61
    %v63 = vpop.xlane.xlu0 %62
    %v64 = vmul.f32 %v60, %v51
    %v65 = vmul.f32 %v63, %v51
    %v66 = vadd.f32 %v64, 1e-05
    %v67 = vadd.f32 %v65, 1e-05
    %v68 = vrsqrt.pop %v66
    %v69 = vmul.f32 %v68, %v66
    %v70 = vmul.f32 %v69, %v68
    %v71 = vmul.f32 0.5, %v70
    %v72 = vsub.f32 1.5, %v71
    %v73 = vmul.f32 %v68, %v72
    %vm74 = vweird.f32 %v66
    %vm75 = vweird.f32 %v68
    %vm76 = vmor %vm74, %vm75
    %v77 = vsel %vm76, %v68, %v73
    %v78 = vrsqrt.pop %v67
    %v79 = vmul.f32 %v78, %v67
    %v80 = vmul.f32 %v79, %v78
    %v81 = vmul.f32 0.5, %v80
    %v82 = vsub.f32 1.5, %v81
    %v83 = vmul.f32 %v78, %v82
    %vm84 = vweird.f32 %v67
    %vm85 = vweird.f32 %v78
    %vm86 = vmor %vm84, %vm85
    %v87 = vsel %vm86, %v78, %v83
    %v88 = vmul.f32 %v54, %v77
    %v89 = vmul.f32 %v55, %v87
    %v90 = vld [vmem:[%s1] sm:$0x1]
    %v92 = vperm.slane %v90, 0
    %v94 = vmul.f32 %v88, %v92
    %v95 = vmul.f32 %v89, %v92
    %v96 = vld [vmem:[%s2] sm:$0x1]
    %v98 = vperm.slane %v96, 0
    %v100 = vadd.f32 %v94, %v98
    %v101 = vadd.f32 %v95, %v98
    %v102 = vld [vmem:[%s3] sm:$0xff]
    %v103 = vld [vmem:[%s3 + $0x8] sm:$0xff]
    %v104 = vld [vmem:[%s3 + $0x10] sm:$0xff]
    %v105 = vld [vmem:[%s3 + $0x18] sm:$0xff]
    %v106 = vld [vmem:[%s3 + $0x20] sm:$0xff]
    %v107 = vld [vmem:[%s3 + $0x28] sm:$0xff]
    %v108 = vld [vmem:[%s3 + $0x30] sm:$0xff]
    %v109 = vld [vmem:[%s3 + $0x38] sm:$0xff]
    %v110 = vld [vmem:[%s3 + $0x40] sm:$0xff]
    %v111 = vld [vmem:[%s3 + $0x48] sm:$0xff]
    %v112 = vld [vmem:[%s3 + $0x50] sm:$0xff]
    %v113 = vld [vmem:[%s3 + $0x58] sm:$0xff]
    %v114 = vld [vmem:[%s3 + $0x60] sm:$0xff]
    %v115 = vld [vmem:[%s3 + $0x68] sm:$0xff]
    %v116 = vld [vmem:[%s3 + $0x70] sm:$0xff]
    %v117 = vld [vmem:[%s3 + $0x78] sm:$0xff]
    %v118 = vld [vmem:[%s3 + $0x80] sm:$0xff]
    %v119 = vld [vmem:[%s3 + $0x88] sm:$0xff]
    %v120 = vld [vmem:[%s3 + $0x90] sm:$0xff]
    %v121 = vld [vmem:[%s3 + $0x98] sm:$0xff]
    %v122 = vld [vmem:[%s3 + $0xa0] sm:$0xff]
    %v123 = vld [vmem:[%s3 + $0xa8] sm:$0xff]
    %v124 = vld [vmem:[%s3 + $0xb0] sm:$0xff]
    %v125 = vld [vmem:[%s3 + $0xb8] sm:$0xff]
    %v126 = vld [vmem:[%s3 + $0xc0] sm:$0xff]
    %v127 = vld [vmem:[%s3 + $0xc8] sm:$0xff]
    %v128 = vld [vmem:[%s3 + $0xd0] sm:$0xff]
    %v129 = vld [vmem:[%s3 + $0xd8] sm:$0xff]
    %v130 = vld [vmem:[%s3 + $0xe0] sm:$0xff]
    %v131 = vld [vmem:[%s3 + $0xe8] sm:$0xff]
    %v132 = vld [vmem:[%s3 + $0xf0] sm:$0xff]
    %v133 = vld [vmem:[%s3 + $0xf8] sm:$0xff]
    %v135 = vsel %vm38, %v100, 0
    %v138 = vsel %vm38, %v101, 0
    %140 = vmatpush.msra.mxu0 0.0
    %141 = vmatpush.msra.mxu0 0.0
    %142 = vmatpush.msra.mxu0 0.0
    %143 = vmatpush.msra.mxu0 0.0
    %144 = vmatpush.msra.mxu0 0.0
    %145 = vmatpush.msra.mxu0 0.0
    %146 = vmatpush.msra.mxu0 0.0
    %147 = vmatpush.msra.mxu0 0.0
    %148 = vmatpush.msra.mxu0 0.0
    %149 = vmatpush.msra.mxu0 0.0
    %150 = vmatpush.msra.mxu0 0.0
    %151 = vmatpush.msra.mxu0 0.0
    %152 = vmatpush.msra.mxu0 %v105
    %153 = vmatpush.msra.mxu0 %v104
    %154 = vmatpush.msra.mxu0 %v103
    %155 = vmatpush.msra.mxu0 %v102
    %156 = vmatmul.f32.gmra.mxu0 %v135
    %v157 = vpop.f32.mrf.mxu0
    %v158 = vadd.f32 0.0, %v157
    %159 = vmatmul.f32.gmra.mxu0 %v138
    %v160 = vpop.f32.mrf.mxu0
    %v161 = vadd.f32 0.0, %v160
    %162 = vdwg.mxu0
    %163 = vmatpush.msra.mxu0 0.0
    %164 = vmatpush.msra.mxu0 0.0
    %165 = vmatpush.msra.mxu0 0.0
    %166 = vmatpush.msra.mxu0 0.0
    %167 = vmatpush.msra.mxu0 0.0
    %168 = vmatpush.msra.mxu0 0.0
    %169 = vmatpush.msra.mxu0 0.0
    %170 = vmatpush.msra.mxu0 0.0
    %171 = vmatpush.msra.mxu0 0.0
    %172 = vmatpush.msra.mxu0 0.0
    %173 = vmatpush.msra.mxu0 0.0
    %174 = vmatpush.msra.mxu0 0.0
    %175 = vmatpush.msra.mxu0 %v109
    %176 = vmatpush.msra.mxu0 %v108
    %177 = vmatpush.msra.mxu0 %v107
    %178 = vmatpush.msra.mxu0 %v106
    %179 = vmatmul.f32.gmra.mxu0 %v135
    %v180 = vpop.f32.mrf.mxu0
    %v181 = vadd.f32 0.0, %v180
    %182 = vmatmul.f32.gmra.mxu0 %v138
    %v183 = vpop.f32.mrf.mxu0
    %v184 = vadd.f32 0.0, %v183
    %185 = vdwg.mxu0
    %186 = vmatpush.msra.mxu0 0.0
    %187 = vmatpush.msra.mxu0 0.0
    %188 = vmatpush.msra.mxu0 0.0
    %189 = vmatpush.msra.mxu0 0.0
    %190 = vmatpush.msra.mxu0 0.0
    %191 = vmatpush.msra.mxu0 0.0
    %192 = vmatpush.msra.mxu0 0.0
    %193 = vmatpush.msra.mxu0 0.0
    %194 = vmatpush.msra.mxu0 0.0
    %195 = vmatpush.msra.mxu0 0.0
    %196 = vmatpush.msra.mxu0 0.0
    %197 = vmatpush.msra.mxu0 0.0
    %198 = vmatpush.msra.mxu0 %v113
    %199 = vmatpush.msra.mxu0 %v112
    %200 = vmatpush.msra.mxu0 %v111
    %201 = vmatpush.msra.mxu0 %v110
    %202 = vmatmul.f32.gmra.mxu0 %v135
    %v203 = vpop.f32.mrf.mxu0
    %v204 = vadd.f32 0.0, %v203
    %205 = vmatmul.f32.gmra.mxu0 %v138
    %v206 = vpop.f32.mrf.mxu0
    %v207 = vadd.f32 0.0, %v206
    %208 = vdwg.mxu0
    %209 = vmatpush.msra.mxu0 0.0
    %210 = vmatpush.msra.mxu0 0.0
    %211 = vmatpush.msra.mxu0 0.0
    %212 = vmatpush.msra.mxu0 0.0
    %213 = vmatpush.msra.mxu0 0.0
    %214 = vmatpush.msra.mxu0 0.0
    %215 = vmatpush.msra.mxu0 0.0
    %216 = vmatpush.msra.mxu0 0.0
    %217 = vmatpush.msra.mxu0 0.0
    %218 = vmatpush.msra.mxu0 0.0
    %219 = vmatpush.msra.mxu0 0.0
    %220 = vmatpush.msra.mxu0 0.0
    %221 = vmatpush.msra.mxu0 %v117
    %222 = vmatpush.msra.mxu0 %v116
    %223 = vmatpush.msra.mxu0 %v115
    %224 = vmatpush.msra.mxu0 %v114
    %225 = vmatmul.f32.gmra.mxu0 %v135
    %v226 = vpop.f32.mrf.mxu0
    %v227 = vadd.f32 0.0, %v226
    %228 = vmatmul.f32.gmra.mxu0 %v138
    %v229 = vpop.f32.mrf.mxu0
    %v230 = vadd.f32 0.0, %v229
    %231 = vdwg.mxu0
    %232 = vmatpush.msra.mxu0 0.0
    %233 = vmatpush.msra.mxu0 0.0
    %234 = vmatpush.msra.mxu0 0.0
    %235 = vmatpush.msra.mxu0 0.0
    %236 = vmatpush.msra.mxu0 0.0
    %237 = vmatpush.msra.mxu0 0.0
    %238 = vmatpush.msra.mxu0 0.0
    %239 = vmatpush.msra.mxu0 0.0
    %240 = vmatpush.msra.mxu0 0.0
    %241 = vmatpush.msra.mxu0 0.0
    %242 = vmatpush.msra.mxu0 0.0
    %243 = vmatpush.msra.mxu0 0.0
    %244 = vmatpush.msra.mxu0 %v121
    %245 = vmatpush.msra.mxu0 %v120
    %246 = vmatpush.msra.mxu0 %v119
    %247 = vmatpush.msra.mxu0 %v118
    %248 = vmatmul.f32.gmra.mxu0 %v135
    %v249 = vpop.f32.mrf.mxu0
    %v250 = vadd.f32 0.0, %v249
    %251 = vmatmul.f32.gmra.mxu0 %v138
    %v252 = vpop.f32.mrf.mxu0
    %v253 = vadd.f32 0.0, %v252
    %254 = vdwg.mxu0
    %255 = vmatpush.msra.mxu0 0.0
    %256 = vmatpush.msra.mxu0 0.0
    %257 = vmatpush.msra.mxu0 0.0
    %258 = vmatpush.msra.mxu0 0.0
    %259 = vmatpush.msra.mxu0 0.0
    %260 = vmatpush.msra.mxu0 0.0
    %261 = vmatpush.msra.mxu0 0.0
    %262 = vmatpush.msra.mxu0 0.0
    %263 = vmatpush.msra.mxu0 0.0
    %264 = vmatpush.msra.mxu0 0.0
    %265 = vmatpush.msra.mxu0 0.0
    %266 = vmatpush.msra.mxu0 0.0
    %267 = vmatpush.msra.mxu0 %v125
    %268 = vmatpush.msra.mxu0 %v124
    %269 = vmatpush.msra.mxu0 %v123
    %270 = vmatpush.msra.mxu0 %v122
    %271 = vmatmul.f32.gmra.mxu0 %v135
    %v272 = vpop.f32.mrf.mxu0
    %v273 = vadd.f32 0.0, %v272
    %274 = vmatmul.f32.gmra.mxu0 %v138
    %v275 = vpop.f32.mrf.mxu0
    %v276 = vadd.f32 0.0, %v275
    %277 = vdwg.mxu0
    %278 = vmatpush.msra.mxu0 0.0
    %279 = vmatpush.msra.mxu0 0.0
    %280 = vmatpush.msra.mxu0 0.0
    %281 = vmatpush.msra.mxu0 0.0
    %282 = vmatpush.msra.mxu0 0.0
    %283 = vmatpush.msra.mxu0 0.0
    %284 = vmatpush.msra.mxu0 0.0
    %285 = vmatpush.msra.mxu0 0.0
    %286 = vmatpush.msra.mxu0 0.0
    %287 = vmatpush.msra.mxu0 0.0
    %288 = vmatpush.msra.mxu0 0.0
    %289 = vmatpush.msra.mxu0 0.0
    %290 = vmatpush.msra.mxu0 %v129
    %291 = vmatpush.msra.mxu0 %v128
    %292 = vmatpush.msra.mxu0 %v127
    %293 = vmatpush.msra.mxu0 %v126
    %294 = vmatmul.f32.gmra.mxu0 %v135
    %v295 = vpop.f32.mrf.mxu0
    %v296 = vadd.f32 0.0, %v295
    %297 = vmatmul.f32.gmra.mxu0 %v138
    %v298 = vpop.f32.mrf.mxu0
    %v299 = vadd.f32 0.0, %v298
    %300 = vdwg.mxu0
    %301 = vmatpush.msra.mxu0 0.0
    %302 = vmatpush.msra.mxu0 0.0
    %303 = vmatpush.msra.mxu0 0.0
    %304 = vmatpush.msra.mxu0 0.0
    %305 = vmatpush.msra.mxu0 0.0
    %306 = vmatpush.msra.mxu0 0.0
    %307 = vmatpush.msra.mxu0 0.0
    %308 = vmatpush.msra.mxu0 0.0
    %309 = vmatpush.msra.mxu0 0.0
    %310 = vmatpush.msra.mxu0 0.0
    %311 = vmatpush.msra.mxu0 0.0
    %312 = vmatpush.msra.mxu0 0.0
    %313 = vmatpush.msra.mxu0 %v133
    %314 = vmatpush.msra.mxu0 %v132
    %315 = vmatpush.msra.mxu0 %v131
    %316 = vmatpush.msra.mxu0 %v130
    %317 = vmatmul.f32.gmra.mxu0 %v135
    %v318 = vpop.f32.mrf.mxu0
    %v319 = vadd.f32 0.0, %v318
    %320 = vmatmul.f32.gmra.mxu0 %v138
    %v321 = vpop.f32.mrf.mxu0
    %v322 = vadd.f32 0.0, %v321
    %323 = vdwg.mxu0
    %v324 = vld [vmem:[%s4] sm:$0xff]
    %v325 = vld [vmem:[%s4 + $0x8] sm:$0xff]
    %v326 = vld [vmem:[%s4 + $0x10] sm:$0xff]
    %v327 = vld [vmem:[%s4 + $0x18] sm:$0xff]
    %v328 = vld [vmem:[%s4 + $0x20] sm:$0xff]
    %v329 = vld [vmem:[%s4 + $0x28] sm:$0xff]
    %v330 = vld [vmem:[%s4 + $0x30] sm:$0xff]
    %v331 = vld [vmem:[%s4 + $0x38] sm:$0xff]
    %v332 = vld [vmem:[%s4 + $0x40] sm:$0xff]
    %v333 = vld [vmem:[%s4 + $0x48] sm:$0xff]
    %v334 = vld [vmem:[%s4 + $0x50] sm:$0xff]
    %v335 = vld [vmem:[%s4 + $0x58] sm:$0xff]
    %v336 = vld [vmem:[%s4 + $0x60] sm:$0xff]
    %v337 = vld [vmem:[%s4 + $0x68] sm:$0xff]
    %v338 = vld [vmem:[%s4 + $0x70] sm:$0xff]
    %v339 = vld [vmem:[%s4 + $0x78] sm:$0xff]
    %v340 = vld [vmem:[%s4 + $0x80] sm:$0xff]
    %v341 = vld [vmem:[%s4 + $0x88] sm:$0xff]
    %v342 = vld [vmem:[%s4 + $0x90] sm:$0xff]
    %v343 = vld [vmem:[%s4 + $0x98] sm:$0xff]
    %v344 = vld [vmem:[%s4 + $0xa0] sm:$0xff]
    %v345 = vld [vmem:[%s4 + $0xa8] sm:$0xff]
    %v346 = vld [vmem:[%s4 + $0xb0] sm:$0xff]
    %v347 = vld [vmem:[%s4 + $0xb8] sm:$0xff]
    %v348 = vld [vmem:[%s4 + $0xc0] sm:$0xff]
    %v349 = vld [vmem:[%s4 + $0xc8] sm:$0xff]
    %v350 = vld [vmem:[%s4 + $0xd0] sm:$0xff]
    %v351 = vld [vmem:[%s4 + $0xd8] sm:$0xff]
    %v352 = vld [vmem:[%s4 + $0xe0] sm:$0xff]
    %v353 = vld [vmem:[%s4 + $0xe8] sm:$0xff]
    %v354 = vld [vmem:[%s4 + $0xf0] sm:$0xff]
    %v355 = vld [vmem:[%s4 + $0xf8] sm:$0xff]
    %356 = vmatpush.msra.mxu0 0.0
    %357 = vmatpush.msra.mxu0 0.0
    %358 = vmatpush.msra.mxu0 0.0
    %359 = vmatpush.msra.mxu0 0.0
    %360 = vmatpush.msra.mxu0 0.0
    %361 = vmatpush.msra.mxu0 0.0
    %362 = vmatpush.msra.mxu0 0.0
    %363 = vmatpush.msra.mxu0 0.0
    %364 = vmatpush.msra.mxu0 0.0
    %365 = vmatpush.msra.mxu0 0.0
    %366 = vmatpush.msra.mxu0 0.0
    %367 = vmatpush.msra.mxu0 0.0
    %368 = vmatpush.msra.mxu0 %v327
    %369 = vmatpush.msra.mxu0 %v326
    %370 = vmatpush.msra.mxu0 %v325
    %371 = vmatpush.msra.mxu0 %v324
    %372 = vmatmul.f32.gmra.mxu0 %v135
    %v373 = vpop.f32.mrf.mxu0
    %v374 = vadd.f32 0.0, %v373
    %375 = vmatmul.f32.gmra.mxu0 %v138
    %v376 = vpop.f32.mrf.mxu0
    %v377 = vadd.f32 0.0, %v376
    %378 = vdwg.mxu0
    %379 = vmatpush.msra.mxu0 0.0
    %380 = vmatpush.msra.mxu0 0.0
    %381 = vmatpush.msra.mxu0 0.0
    %382 = vmatpush.msra.mxu0 0.0
    %383 = vmatpush.msra.mxu0 0.0
    %384 = vmatpush.msra.mxu0 0.0
    %385 = vmatpush.msra.mxu0 0.0
    %386 = vmatpush.msra.mxu0 0.0
    %387 = vmatpush.msra.mxu0 0.0
    %388 = vmatpush.msra.mxu0 0.0
    %389 = vmatpush.msra.mxu0 0.0
    %390 = vmatpush.msra.mxu0 0.0
    %391 = vmatpush.msra.mxu0 %v331
    %392 = vmatpush.msra.mxu0 %v330
    %393 = vmatpush.msra.mxu0 %v329
    %394 = vmatpush.msra.mxu0 %v328
    %395 = vmatmul.f32.gmra.mxu0 %v135
    %v396 = vpop.f32.mrf.mxu0
    %v397 = vadd.f32 0.0, %v396
    %398 = vmatmul.f32.gmra.mxu0 %v138
    %v399 = vpop.f32.mrf.mxu0
    %v400 = vadd.f32 0.0, %v399
    %401 = vdwg.mxu0
    %402 = vmatpush.msra.mxu0 0.0
    %403 = vmatpush.msra.mxu0 0.0
    %404 = vmatpush.msra.mxu0 0.0
    %405 = vmatpush.msra.mxu0 0.0
    %406 = vmatpush.msra.mxu0 0.0
    %407 = vmatpush.msra.mxu0 0.0
    %408 = vmatpush.msra.mxu0 0.0
    %409 = vmatpush.msra.mxu0 0.0
    %410 = vmatpush.msra.mxu0 0.0
    %411 = vmatpush.msra.mxu0 0.0
    %412 = vmatpush.msra.mxu0 0.0
    %413 = vmatpush.msra.mxu0 0.0
    %414 = vmatpush.msra.mxu0 %v335
    %415 = vmatpush.msra.mxu0 %v334
    %416 = vmatpush.msra.mxu0 %v333
    %417 = vmatpush.msra.mxu0 %v332
    %418 = vmatmul.f32.gmra.mxu0 %v135
    %v419 = vpop.f32.mrf.mxu0
    %v420 = vadd.f32 0.0, %v419
    %421 = vmatmul.f32.gmra.mxu0 %v138
    %v422 = vpop.f32.mrf.mxu0
    %v423 = vadd.f32 0.0, %v422
    %424 = vdwg.mxu0
    %425 = vmatpush.msra.mxu0 0.0
    %426 = vmatpush.msra.mxu0 0.0
    %427 = vmatpush.msra.mxu0 0.0
    %428 = vmatpush.msra.mxu0 0.0
    %429 = vmatpush.msra.mxu0 0.0
    %430 = vmatpush.msra.mxu0 0.0
    %431 = vmatpush.msra.mxu0 0.0
    %432 = vmatpush.msra.mxu0 0.0
    %433 = vmatpush.msra.mxu0 0.0
    %434 = vmatpush.msra.mxu0 0.0
    %435 = vmatpush.msra.mxu0 0.0
    %436 = vmatpush.msra.mxu0 0.0
    %437 = vmatpush.msra.mxu0 %v339
    %438 = vmatpush.msra.mxu0 %v338
    %439 = vmatpush.msra.mxu0 %v337
    %440 = vmatpush.msra.mxu0 %v336
    %441 = vmatmul.f32.gmra.mxu0 %v135
    %v442 = vpop.f32.mrf.mxu0
    %v443 = vadd.f32 0.0, %v442
    %444 = vmatmul.f32.gmra.mxu0 %v138
    %v445 = vpop.f32.mrf.mxu0
    %v446 = vadd.f32 0.0, %v445
    %447 = vdwg.mxu0
    %448 = vmatpush.msra.mxu0 0.0
    %449 = vmatpush.msra.mxu0 0.0
    %450 = vmatpush.msra.mxu0 0.0
    %451 = vmatpush.msra.mxu0 0.0
    %452 = vmatpush.msra.mxu0 0.0
    %453 = vmatpush.msra.mxu0 0.0
    %454 = vmatpush.msra.mxu0 0.0
    %455 = vmatpush.msra.mxu0 0.0
    %456 = vmatpush.msra.mxu0 0.0
    %457 = vmatpush.msra.mxu0 0.0
    %458 = vmatpush.msra.mxu0 0.0
    %459 = vmatpush.msra.mxu0 0.0
    %460 = vmatpush.msra.mxu0 %v343
    %461 = vmatpush.msra.mxu0 %v342
    %462 = vmatpush.msra.mxu0 %v341
    %463 = vmatpush.msra.mxu0 %v340
    %464 = vmatmul.f32.gmra.mxu0 %v135
    %v465 = vpop.f32.mrf.mxu0
    %v466 = vadd.f32 0.0, %v465
    %467 = vmatmul.f32.gmra.mxu0 %v138
    %v468 = vpop.f32.mrf.mxu0
    %v469 = vadd.f32 0.0, %v468
    %470 = vdwg.mxu0
    %471 = vmatpush.msra.mxu0 0.0
    %472 = vmatpush.msra.mxu0 0.0
    %473 = vmatpush.msra.mxu0 0.0
    %474 = vmatpush.msra.mxu0 0.0
    %475 = vmatpush.msra.mxu0 0.0
    %476 = vmatpush.msra.mxu0 0.0
    %477 = vmatpush.msra.mxu0 0.0
    %478 = vmatpush.msra.mxu0 0.0
    %479 = vmatpush.msra.mxu0 0.0
    %480 = vmatpush.msra.mxu0 0.0
    %481 = vmatpush.msra.mxu0 0.0
    %482 = vmatpush.msra.mxu0 0.0
    %483 = vmatpush.msra.mxu0 %v347
    %484 = vmatpush.msra.mxu0 %v346
    %485 = vmatpush.msra.mxu0 %v345
    %486 = vmatpush.msra.mxu0 %v344
    %487 = vmatmul.f32.gmra.mxu0 %v135
    %v488 = vpop.f32.mrf.mxu0
    %v489 = vadd.f32 0.0, %v488
    %490 = vmatmul.f32.gmra.mxu0 %v138
    %v491 = vpop.f32.mrf.mxu0
    %v492 = vadd.f32 0.0, %v491
    %493 = vdwg.mxu0
    %494 = vmatpush.msra.mxu0 0.0
    %495 = vmatpush.msra.mxu0 0.0
    %496 = vmatpush.msra.mxu0 0.0
    %497 = vmatpush.msra.mxu0 0.0
    %498 = vmatpush.msra.mxu0 0.0
    %499 = vmatpush.msra.mxu0 0.0
    %500 = vmatpush.msra.mxu0 0.0
    %501 = vmatpush.msra.mxu0 0.0
    %502 = vmatpush.msra.mxu0 0.0
    %503 = vmatpush.msra.mxu0 0.0
    %504 = vmatpush.msra.mxu0 0.0
    %505 = vmatpush.msra.mxu0 0.0
    %506 = vmatpush.msra.mxu0 %v351
    %507 = vmatpush.msra.mxu0 %v350
    %508 = vmatpush.msra.mxu0 %v349
    %509 = vmatpush.msra.mxu0 %v348
    %510 = vmatmul.f32.gmra.mxu0 %v135
    %v511 = vpop.f32.mrf.mxu0
    %v512 = vadd.f32 0.0, %v511
    %513 = vmatmul.f32.gmra.mxu0 %v138
    %v514 = vpop.f32.mrf.mxu0
    %v515 = vadd.f32 0.0, %v514
    %516 = vdwg.mxu0
    %517 = vmatpush.msra.mxu0 0.0
    %518 = vmatpush.msra.mxu0 0.0
    %519 = vmatpush.msra.mxu0 0.0
    %520 = vmatpush.msra.mxu0 0.0
    %521 = vmatpush.msra.mxu0 0.0
    %522 = vmatpush.msra.mxu0 0.0
    %523 = vmatpush.msra.mxu0 0.0
    %524 = vmatpush.msra.mxu0 0.0
    %525 = vmatpush.msra.mxu0 0.0
    %526 = vmatpush.msra.mxu0 0.0
    %527 = vmatpush.msra.mxu0 0.0
    %528 = vmatpush.msra.mxu0 0.0
    %529 = vmatpush.msra.mxu0 %v355
    %530 = vmatpush.msra.mxu0 %v354
    %531 = vmatpush.msra.mxu0 %v353
    %532 = vmatpush.msra.mxu0 %v352
    %533 = vmatmul.f32.gmra.mxu0 %v135
    %v534 = vpop.f32.mrf.mxu0
    %v535 = vadd.f32 0.0, %v534
    %536 = vmatmul.f32.gmra.mxu0 %v138
    %v537 = vpop.f32.mrf.mxu0
    %v538 = vadd.f32 0.0, %v537
    %539 = vdwg.mxu0
    %v540 = vld [vmem:[%s5] sm:$0xff]
    %v541 = vld [vmem:[%s5 + $0x8] sm:$0xff]
    %v542 = vld [vmem:[%s5 + $0x10] sm:$0xff]
    %v543 = vld [vmem:[%s5 + $0x18] sm:$0xff]
    %v544 = vld [vmem:[%s5 + $0x20] sm:$0xff]
    %v545 = vld [vmem:[%s5 + $0x28] sm:$0xff]
    %v546 = vld [vmem:[%s5 + $0x30] sm:$0xff]
    %v547 = vld [vmem:[%s5 + $0x38] sm:$0xff]
    %v548 = vld [vmem:[%s5 + $0x40] sm:$0xff]
    %v549 = vld [vmem:[%s5 + $0x48] sm:$0xff]
    %v550 = vld [vmem:[%s5 + $0x50] sm:$0xff]
    %v551 = vld [vmem:[%s5 + $0x58] sm:$0xff]
    %v552 = vld [vmem:[%s5 + $0x60] sm:$0xff]
    %v553 = vld [vmem:[%s5 + $0x68] sm:$0xff]
    %v554 = vld [vmem:[%s5 + $0x70] sm:$0xff]
    %v555 = vld [vmem:[%s5 + $0x78] sm:$0xff]
    %v556 = vld [vmem:[%s5 + $0x80] sm:$0xff]
    %v557 = vld [vmem:[%s5 + $0x88] sm:$0xff]
    %v558 = vld [vmem:[%s5 + $0x90] sm:$0xff]
    %v559 = vld [vmem:[%s5 + $0x98] sm:$0xff]
    %v560 = vld [vmem:[%s5 + $0xa0] sm:$0xff]
    %v561 = vld [vmem:[%s5 + $0xa8] sm:$0xff]
    %v562 = vld [vmem:[%s5 + $0xb0] sm:$0xff]
    %v563 = vld [vmem:[%s5 + $0xb8] sm:$0xff]
    %v564 = vld [vmem:[%s5 + $0xc0] sm:$0xff]
    %v565 = vld [vmem:[%s5 + $0xc8] sm:$0xff]
    %v566 = vld [vmem:[%s5 + $0xd0] sm:$0xff]
    %v567 = vld [vmem:[%s5 + $0xd8] sm:$0xff]
    %v568 = vld [vmem:[%s5 + $0xe0] sm:$0xff]
    %v569 = vld [vmem:[%s5 + $0xe8] sm:$0xff]
    %v570 = vld [vmem:[%s5 + $0xf0] sm:$0xff]
    %v571 = vld [vmem:[%s5 + $0xf8] sm:$0xff]
    %572 = vmatpush.msra.mxu0 0.0
    %573 = vmatpush.msra.mxu0 0.0
    %574 = vmatpush.msra.mxu0 0.0
    %575 = vmatpush.msra.mxu0 0.0
    %576 = vmatpush.msra.mxu0 0.0
    %577 = vmatpush.msra.mxu0 0.0
    %578 = vmatpush.msra.mxu0 0.0
    %579 = vmatpush.msra.mxu0 0.0
    %580 = vmatpush.msra.mxu0 0.0
    %581 = vmatpush.msra.mxu0 0.0
    %582 = vmatpush.msra.mxu0 0.0
    %583 = vmatpush.msra.mxu0 0.0
    %584 = vmatpush.msra.mxu0 %v543
    %585 = vmatpush.msra.mxu0 %v542
    %586 = vmatpush.msra.mxu0 %v541
    %587 = vmatpush.msra.mxu0 %v540
    %588 = vmatmul.f32.gmra.mxu0 %v135
    %v589 = vpop.f32.mrf.mxu0
    %v590 = vadd.f32 0.0, %v589
    %591 = vmatmul.f32.gmra.mxu0 %v138
    %v592 = vpop.f32.mrf.mxu0
    %v593 = vadd.f32 0.0, %v592
    %594 = vdwg.mxu0
    %595 = vmatpush.msra.mxu0 0.0
    %596 = vmatpush.msra.mxu0 0.0
    %597 = vmatpush.msra.mxu0 0.0
    %598 = vmatpush.msra.mxu0 0.0
    %599 = vmatpush.msra.mxu0 0.0
    %600 = vmatpush.msra.mxu0 0.0
    %601 = vmatpush.msra.mxu0 0.0
    %602 = vmatpush.msra.mxu0 0.0
    %603 = vmatpush.msra.mxu0 0.0
    %604 = vmatpush.msra.mxu0 0.0
    %605 = vmatpush.msra.mxu0 0.0
    %606 = vmatpush.msra.mxu0 0.0
    %607 = vmatpush.msra.mxu0 %v547
    %608 = vmatpush.msra.mxu0 %v546
    %609 = vmatpush.msra.mxu0 %v545
    %610 = vmatpush.msra.mxu0 %v544
    %611 = vmatmul.f32.gmra.mxu0 %v135
    %v612 = vpop.f32.mrf.mxu0
    %v613 = vadd.f32 0.0, %v612
    %614 = vmatmul.f32.gmra.mxu0 %v138
    %v615 = vpop.f32.mrf.mxu0
    %v616 = vadd.f32 0.0, %v615
    %617 = vdwg.mxu0
    %618 = vmatpush.msra.mxu0 0.0
    %619 = vmatpush.msra.mxu0 0.0
    %620 = vmatpush.msra.mxu0 0.0
    %621 = vmatpush.msra.mxu0 0.0
    %622 = vmatpush.msra.mxu0 0.0
    %623 = vmatpush.msra.mxu0 0.0
    %624 = vmatpush.msra.mxu0 0.0
    %625 = vmatpush.msra.mxu0 0.0
    %626 = vmatpush.msra.mxu0 0.0
    %627 = vmatpush.msra.mxu0 0.0
    %628 = vmatpush.msra.mxu0 0.0
    %629 = vmatpush.msra.mxu0 0.0
    %630 = vmatpush.msra.mxu0 %v551
    %631 = vmatpush.msra.mxu0 %v550
    %632 = vmatpush.msra.mxu0 %v549
    %633 = vmatpush.msra.mxu0 %v548
    %634 = vmatmul.f32.gmra.mxu0 %v135
    %v635 = vpop.f32.mrf.mxu0
    %v636 = vadd.f32 0.0, %v635
    %637 = vmatmul.f32.gmra.mxu0 %v138
    %v638 = vpop.f32.mrf.mxu0
    %v639 = vadd.f32 0.0, %v638
    %640 = vdwg.mxu0
    %641 = vmatpush.msra.mxu0 0.0
    %642 = vmatpush.msra.mxu0 0.0
    %643 = vmatpush.msra.mxu0 0.0
    %644 = vmatpush.msra.mxu0 0.0
    %645 = vmatpush.msra.mxu0 0.0
    %646 = vmatpush.msra.mxu0 0.0
    %647 = vmatpush.msra.mxu0 0.0
    %648 = vmatpush.msra.mxu0 0.0
    %649 = vmatpush.msra.mxu0 0.0
    %650 = vmatpush.msra.mxu0 0.0
    %651 = vmatpush.msra.mxu0 0.0
    %652 = vmatpush.msra.mxu0 0.0
    %653 = vmatpush.msra.mxu0 %v555
    %654 = vmatpush.msra.mxu0 %v554
    %655 = vmatpush.msra.mxu0 %v553
    %656 = vmatpush.msra.mxu0 %v552
    %657 = vmatmul.f32.gmra.mxu0 %v135
    %v658 = vpop.f32.mrf.mxu0
    %v659 = vadd.f32 0.0, %v658
    %660 = vmatmul.f32.gmra.mxu0 %v138
    %v661 = vpop.f32.mrf.mxu0
    %v662 = vadd.f32 0.0, %v661
    %663 = vdwg.mxu0
    %664 = vmatpush.msra.mxu0 0.0
    %665 = vmatpush.msra.mxu0 0.0
    %666 = vmatpush.msra.mxu0 0.0
    %667 = vmatpush.msra.mxu0 0.0
    %668 = vmatpush.msra.mxu0 0.0
    %669 = vmatpush.msra.mxu0 0.0
    %670 = vmatpush.msra.mxu0 0.0
    %671 = vmatpush.msra.mxu0 0.0
    %672 = vmatpush.msra.mxu0 0.0
    %673 = vmatpush.msra.mxu0 0.0
    %674 = vmatpush.msra.mxu0 0.0
    %675 = vmatpush.msra.mxu0 0.0
    %676 = vmatpush.msra.mxu0 %v559
    %677 = vmatpush.msra.mxu0 %v558
    %678 = vmatpush.msra.mxu0 %v557
    %679 = vmatpush.msra.mxu0 %v556
    %680 = vmatmul.f32.gmra.mxu0 %v135
    %v681 = vpop.f32.mrf.mxu0
    %v682 = vadd.f32 0.0, %v681
    %683 = vmatmul.f32.gmra.mxu0 %v138
    %v684 = vpop.f32.mrf.mxu0
    %v685 = vadd.f32 0.0, %v684
    %686 = vdwg.mxu0
    %687 = vmatpush.msra.mxu0 0.0
    %688 = vmatpush.msra.mxu0 0.0
    %689 = vmatpush.msra.mxu0 0.0
    %690 = vmatpush.msra.mxu0 0.0
    %691 = vmatpush.msra.mxu0 0.0
    %692 = vmatpush.msra.mxu0 0.0
    %693 = vmatpush.msra.mxu0 0.0
    %694 = vmatpush.msra.mxu0 0.0
    %695 = vmatpush.msra.mxu0 0.0
    %696 = vmatpush.msra.mxu0 0.0
    %697 = vmatpush.msra.mxu0 0.0
    %698 = vmatpush.msra.mxu0 0.0
    %699 = vmatpush.msra.mxu0 %v563
    %700 = vmatpush.msra.mxu0 %v562
    %701 = vmatpush.msra.mxu0 %v561
    %702 = vmatpush.msra.mxu0 %v560
    %703 = vmatmul.f32.gmra.mxu0 %v135
    %v704 = vpop.f32.mrf.mxu0
    %v705 = vadd.f32 0.0, %v704
    %706 = vmatmul.f32.gmra.mxu0 %v138
    %v707 = vpop.f32.mrf.mxu0
    %v708 = vadd.f32 0.0, %v707
    %709 = vdwg.mxu0
    %710 = vmatpush.msra.mxu0 0.0
    %711 = vmatpush.msra.mxu0 0.0
    %712 = vmatpush.msra.mxu0 0.0
    %713 = vmatpush.msra.mxu0 0.0
    %714 = vmatpush.msra.mxu0 0.0
    %715 = vmatpush.msra.mxu0 0.0
    %716 = vmatpush.msra.mxu0 0.0
    %717 = vmatpush.msra.mxu0 0.0
    %718 = vmatpush.msra.mxu0 0.0
    %719 = vmatpush.msra.mxu0 0.0
    %720 = vmatpush.msra.mxu0 0.0
    %721 = vmatpush.msra.mxu0 0.0
    %722 = vmatpush.msra.mxu0 %v567
    %723 = vmatpush.msra.mxu0 %v566
    %724 = vmatpush.msra.mxu0 %v565
    %725 = vmatpush.msra.mxu0 %v564
    %726 = vmatmul.f32.gmra.mxu0 %v135
    %v727 = vpop.f32.mrf.mxu0
    %v728 = vadd.f32 0.0, %v727
    %729 = vmatmul.f32.gmra.mxu0 %v138
    %v730 = vpop.f32.mrf.mxu0
    %v731 = vadd.f32 0.0, %v730
    %732 = vdwg.mxu0
    %733 = vmatpush.msra.mxu0 0.0
    %734 = vmatpush.msra.mxu0 0.0
    %735 = vmatpush.msra.mxu0 0.0
    %736 = vmatpush.msra.mxu0 0.0
    %737 = vmatpush.msra.mxu0 0.0
    %738 = vmatpush.msra.mxu0 0.0
    %739 = vmatpush.msra.mxu0 0.0
    %740 = vmatpush.msra.mxu0 0.0
    %741 = vmatpush.msra.mxu0 0.0
    %742 = vmatpush.msra.mxu0 0.0
    %743 = vmatpush.msra.mxu0 0.0
    %744 = vmatpush.msra.mxu0 0.0
    %745 = vmatpush.msra.mxu0 %v571
    %746 = vmatpush.msra.mxu0 %v570
    %747 = vmatpush.msra.mxu0 %v569
    %748 = vmatpush.msra.mxu0 %v568
    %749 = vmatmul.f32.gmra.mxu0 %v135
    %v750 = vpop.f32.mrf.mxu0
    %v751 = vadd.f32 0.0, %v750
    %752 = vmatmul.f32.gmra.mxu0 %v138
    %v753 = vpop.f32.mrf.mxu0
    %v754 = vadd.f32 0.0, %v753
    %755 = vdwg.mxu0
    %v756 = vld [vmem:[%s9] sm:$0xff]
    %v757 = vld [vmem:[%s9 + $0x8] sm:$0xff]
    %vm758 = vcmask 130048
    %v760 = vsel %vm758, %v158, 0
    %v763 = vsel %vm758, %v161, 0
    %v766 = vsel %vm758, %v374, 0
    %v769 = vsel %vm758, %v377, 0
    %771 = vmatpush.xpose.msra.mxu0 0.0
    %772 = vmatpush.xpose.msra.mxu0 0.0
    %773 = vmatpush.xpose.msra.mxu0 0.0
    %774 = vmatpush.xpose.msra.mxu0 0.0
    %775 = vmatpush.xpose.msra.mxu0 0.0
    %776 = vmatpush.xpose.msra.mxu0 0.0
    %777 = vmatpush.xpose.msra.mxu0 0.0
    %778 = vmatpush.xpose.msra.mxu0 0.0
    %779 = vmatpush.xpose.msra.mxu0 0.0
    %780 = vmatpush.xpose.msra.mxu0 0.0
    %781 = vmatpush.xpose.msra.mxu0 0.0
    %782 = vmatpush.xpose.msra.mxu0 0.0
    %783 = vmatpush.xpose.msra.mxu0 0.0
    %784 = vmatpush.xpose.msra.mxu0 0.0
    %785 = vmatpush.xpose.msra.mxu0 %v769
    %786 = vmatpush.xpose.msra.mxu0 %v766
    %787 = vmatmul.f32.gmra.mxu0 %v760
    %v788 = vpop.f32.mrf.mxu0
    %v789 = vadd.f32 %v756, %v788
    %790 = vmatmul.f32.gmra.mxu0 %v763
    %v791 = vpop.f32.mrf.mxu0
    %v792 = vadd.f32 %v757, %v791
    %793 = vdwg.mxu0
    %v795 = vsel %vm758, %v181, 0
    %v798 = vsel %vm758, %v184, 0
    %v801 = vsel %vm758, %v397, 0
    %v804 = vsel %vm758, %v400, 0
    %806 = vmatpush.xpose.msra.mxu0 0.0
    %807 = vmatpush.xpose.msra.mxu0 0.0
    %808 = vmatpush.xpose.msra.mxu0 0.0
    %809 = vmatpush.xpose.msra.mxu0 0.0
    %810 = vmatpush.xpose.msra.mxu0 0.0
    %811 = vmatpush.xpose.msra.mxu0 0.0
    %812 = vmatpush.xpose.msra.mxu0 0.0
    %813 = vmatpush.xpose.msra.mxu0 0.0
    %814 = vmatpush.xpose.msra.mxu0 0.0
    %815 = vmatpush.xpose.msra.mxu0 0.0
    %816 = vmatpush.xpose.msra.mxu0 0.0
    %817 = vmatpush.xpose.msra.mxu0 0.0
    %818 = vmatpush.xpose.msra.mxu0 0.0
    %819 = vmatpush.xpose.msra.mxu0 0.0
    %820 = vmatpush.xpose.msra.mxu0 %v804
    %821 = vmatpush.xpose.msra.mxu0 %v801
    %822 = vmatmul.f32.gmra.mxu0 %v795
    %v823 = vpop.f32.mrf.mxu0
    %v824 = vadd.f32 %v756, %v823
    %825 = vmatmul.f32.gmra.mxu0 %v798
    %v826 = vpop.f32.mrf.mxu0
    %v827 = vadd.f32 %v757, %v826
    %828 = vdwg.mxu0
    %v830 = vsel %vm758, %v204, 0
    %v833 = vsel %vm758, %v207, 0
    %v836 = vsel %vm758, %v420, 0
    %v839 = vsel %vm758, %v423, 0
    %841 = vmatpush.xpose.msra.mxu0 0.0
    %842 = vmatpush.xpose.msra.mxu0 0.0
    %843 = vmatpush.xpose.msra.mxu0 0.0
    %844 = vmatpush.xpose.msra.mxu0 0.0
    %845 = vmatpush.xpose.msra.mxu0 0.0
    %846 = vmatpush.xpose.msra.mxu0 0.0
    %847 = vmatpush.xpose.msra.mxu0 0.0
    %848 = vmatpush.xpose.msra.mxu0 0.0
    %849 = vmatpush.xpose.msra.mxu0 0.0
    %850 = vmatpush.xpose.msra.mxu0 0.0
    %851 = vmatpush.xpose.msra.mxu0 0.0
    %852 = vmatpush.xpose.msra.mxu0 0.0
    %853 = vmatpush.xpose.msra.mxu0 0.0
    %854 = vmatpush.xpose.msra.mxu0 0.0
    %855 = vmatpush.xpose.msra.mxu0 %v839
    %856 = vmatpush.xpose.msra.mxu0 %v836
    %857 = vmatmul.f32.gmra.mxu0 %v830
    %v858 = vpop.f32.mrf.mxu0
    %v859 = vadd.f32 %v756, %v858
    %860 = vmatmul.f32.gmra.mxu0 %v833
    %v861 = vpop.f32.mrf.mxu0
    %v862 = vadd.f32 %v757, %v861
    %863 = vdwg.mxu0
    %v865 = vsel %vm758, %v227, 0
    %v868 = vsel %vm758, %v230, 0
    %v871 = vsel %vm758, %v443, 0
    %v874 = vsel %vm758, %v446, 0
    %876 = vmatpush.xpose.msra.mxu0 0.0
    %877 = vmatpush.xpose.msra.mxu0 0.0
    %878 = vmatpush.xpose.msra.mxu0 0.0
    %879 = vmatpush.xpose.msra.mxu0 0.0
    %880 = vmatpush.xpose.msra.mxu0 0.0
    %881 = vmatpush.xpose.msra.mxu0 0.0
    %882 = vmatpush.xpose.msra.mxu0 0.0
    %883 = vmatpush.xpose.msra.mxu0 0.0
    %884 = vmatpush.xpose.msra.mxu0 0.0
    %885 = vmatpush.xpose.msra.mxu0 0.0
    %886 = vmatpush.xpose.msra.mxu0 0.0
    %887 = vmatpush.xpose.msra.mxu0 0.0
    %888 = vmatpush.xpose.msra.mxu0 0.0
    %889 = vmatpush.xpose.msra.mxu0 0.0
    %890 = vmatpush.xpose.msra.mxu0 %v874
    %891 = vmatpush.xpose.msra.mxu0 %v871
    %892 = vmatmul.f32.gmra.mxu0 %v865
    %v893 = vpop.f32.mrf.mxu0
    %v894 = vadd.f32 %v756, %v893
    %895 = vmatmul.f32.gmra.mxu0 %v868
    %v896 = vpop.f32.mrf.mxu0
    %v897 = vadd.f32 %v757, %v896
    %898 = vdwg.mxu0
    %v900 = vsel %vm758, %v250, 0
    %v903 = vsel %vm758, %v253, 0
    %v906 = vsel %vm758, %v466, 0
    %v909 = vsel %vm758, %v469, 0
    %911 = vmatpush.xpose.msra.mxu0 0.0
    %912 = vmatpush.xpose.msra.mxu0 0.0
    %913 = vmatpush.xpose.msra.mxu0 0.0
    %914 = vmatpush.xpose.msra.mxu0 0.0
    %915 = vmatpush.xpose.msra.mxu0 0.0
    %916 = vmatpush.xpose.msra.mxu0 0.0
    %917 = vmatpush.xpose.msra.mxu0 0.0
    %918 = vmatpush.xpose.msra.mxu0 0.0
    %919 = vmatpush.xpose.msra.mxu0 0.0
    %920 = vmatpush.xpose.msra.mxu0 0.0
    %921 = vmatpush.xpose.msra.mxu0 0.0
    %922 = vmatpush.xpose.msra.mxu0 0.0
    %923 = vmatpush.xpose.msra.mxu0 0.0
    %924 = vmatpush.xpose.msra.mxu0 0.0
    %925 = vmatpush.xpose.msra.mxu0 %v909
    %926 = vmatpush.xpose.msra.mxu0 %v906
    %927 = vmatmul.f32.gmra.mxu0 %v900
    %v928 = vpop.f32.mrf.mxu0
    %v929 = vadd.f32 %v756, %v928
    %930 = vmatmul.f32.gmra.mxu0 %v903
    %v931 = vpop.f32.mrf.mxu0
    %v932 = vadd.f32 %v757, %v931
    %933 = vdwg.mxu0
    %v935 = vsel %vm758, %v273, 0
    %v938 = vsel %vm758, %v276, 0
    %v941 = vsel %vm758, %v489, 0
    %v944 = vsel %vm758, %v492, 0
    %946 = vmatpush.xpose.msra.mxu0 0.0
    %947 = vmatpush.xpose.msra.mxu0 0.0
    %948 = vmatpush.xpose.msra.mxu0 0.0
    %949 = vmatpush.xpose.msra.mxu0 0.0
    %950 = vmatpush.xpose.msra.mxu0 0.0
    %951 = vmatpush.xpose.msra.mxu0 0.0
    %952 = vmatpush.xpose.msra.mxu0 0.0
    %953 = vmatpush.xpose.msra.mxu0 0.0
    %954 = vmatpush.xpose.msra.mxu0 0.0
    %955 = vmatpush.xpose.msra.mxu0 0.0
    %956 = vmatpush.xpose.msra.mxu0 0.0
    %957 = vmatpush.xpose.msra.mxu0 0.0
    %958 = vmatpush.xpose.msra.mxu0 0.0
    %959 = vmatpush.xpose.msra.mxu0 0.0
    %960 = vmatpush.xpose.msra.mxu0 %v944
    %961 = vmatpush.xpose.msra.mxu0 %v941
    %962 = vmatmul.f32.gmra.mxu0 %v935
    %v963 = vpop.f32.mrf.mxu0
    %v964 = vadd.f32 %v756, %v963
    %965 = vmatmul.f32.gmra.mxu0 %v938
    %v966 = vpop.f32.mrf.mxu0
    %v967 = vadd.f32 %v757, %v966
    %968 = vdwg.mxu0
    %v970 = vsel %vm758, %v296, 0
    %v973 = vsel %vm758, %v299, 0
    %v976 = vsel %vm758, %v512, 0
    %v979 = vsel %vm758, %v515, 0
    %981 = vmatpush.xpose.msra.mxu0 0.0
    %982 = vmatpush.xpose.msra.mxu0 0.0
    %983 = vmatpush.xpose.msra.mxu0 0.0
    %984 = vmatpush.xpose.msra.mxu0 0.0
    %985 = vmatpush.xpose.msra.mxu0 0.0
    %986 = vmatpush.xpose.msra.mxu0 0.0
    %987 = vmatpush.xpose.msra.mxu0 0.0
    %988 = vmatpush.xpose.msra.mxu0 0.0
    %989 = vmatpush.xpose.msra.mxu0 0.0
    %990 = vmatpush.xpose.msra.mxu0 0.0
    %991 = vmatpush.xpose.msra.mxu0 0.0
    %992 = vmatpush.xpose.msra.mxu0 0.0
    %993 = vmatpush.xpose.msra.mxu0 0.0
    %994 = vmatpush.xpose.msra.mxu0 0.0
    %995 = vmatpush.xpose.msra.mxu0 %v979
    %996 = vmatpush.xpose.msra.mxu0 %v976
    %997 = vmatmul.f32.gmra.mxu0 %v970
    %v998 = vpop.f32.mrf.mxu0
    %v999 = vadd.f32 %v756, %v998
    %1000 = vmatmul.f32.gmra.mxu0 %v973
    %v1001 = vpop.f32.mrf.mxu0
    %v1002 = vadd.f32 %v757, %v1001
    %1003 = vdwg.mxu0
    %v1005 = vsel %vm758, %v319, 0
    %v1008 = vsel %vm758, %v322, 0
    %v1011 = vsel %vm758, %v535, 0
    %v1014 = vsel %vm758, %v538, 0
    %1016 = vmatpush.xpose.msra.mxu0 0.0
    %1017 = vmatpush.xpose.msra.mxu0 0.0
    %1018 = vmatpush.xpose.msra.mxu0 0.0
    %1019 = vmatpush.xpose.msra.mxu0 0.0
    %1020 = vmatpush.xpose.msra.mxu0 0.0
    %1021 = vmatpush.xpose.msra.mxu0 0.0
    %1022 = vmatpush.xpose.msra.mxu0 0.0
    %1023 = vmatpush.xpose.msra.mxu0 0.0
    %1024 = vmatpush.xpose.msra.mxu0 0.0
    %1025 = vmatpush.xpose.msra.mxu0 0.0
    %1026 = vmatpush.xpose.msra.mxu0 0.0
    %1027 = vmatpush.xpose.msra.mxu0 0.0
    %1028 = vmatpush.xpose.msra.mxu0 0.0
    %1029 = vmatpush.xpose.msra.mxu0 0.0
    %1030 = vmatpush.xpose.msra.mxu0 %v1014
    %1031 = vmatpush.xpose.msra.mxu0 %v1011
    %1032 = vmatmul.f32.gmra.mxu0 %v1005
    %v1033 = vpop.f32.mrf.mxu0
    %v1034 = vadd.f32 %v756, %v1033
    %1035 = vmatmul.f32.gmra.mxu0 %v1008
    %v1036 = vpop.f32.mrf.mxu0
    %v1037 = vadd.f32 %v757, %v1036
    %1038 = vdwg.mxu0
    %v1039 = vmul.f32 %v789, 0.25
    %v1040 = vmul.f32 %v792, 0.25
    %v1041 = vmul.f32 %v824, 0.25
    %v1042 = vmul.f32 %v827, 0.25
    %v1043 = vmul.f32 %v859, 0.25
    %v1044 = vmul.f32 %v862, 0.25
    %v1045 = vmul.f32 %v894, 0.25
    %v1046 = vmul.f32 %v897, 0.25
    %v1047 = vmul.f32 %v929, 0.25
    %v1048 = vmul.f32 %v932, 0.25
    %v1049 = vmul.f32 %v964, 0.25
    %v1050 = vmul.f32 %v967, 0.25
    %v1051 = vmul.f32 %v999, 0.25
    %v1052 = vmul.f32 %v1002, 0.25
    %v1053 = vmul.f32 %v1034, 0.25
    %v1054 = vmul.f32 %v1037, 0.25
    %v1055 = vsel %vm758, %v1039, -inf
    %1056 = vmax.xlane.f32.xlu0 %v1055
    %v1057 = vpop.xlane.xlu0 %1056
    %v1058 = vsel %vm758, %v1040, -inf
    %1059 = vmax.xlane.f32.xlu0 %v1058
    %v1060 = vpop.xlane.xlu0 %1059
    %v1061 = vsel %vm758, %v1041, -inf
    %1062 = vmax.xlane.f32.xlu0 %v1061
    %v1063 = vpop.xlane.xlu0 %1062
    %v1064 = vsel %vm758, %v1042, -inf
    %1065 = vmax.xlane.f32.xlu0 %v1064
    %v1066 = vpop.xlane.xlu0 %1065
    %v1067 = vsel %vm758, %v1043, -inf
    %1068 = vmax.xlane.f32.xlu0 %v1067
    %v1069 = vpop.xlane.xlu0 %1068
    %v1070 = vsel %vm758, %v1044, -inf
    %1071 = vmax.xlane.f32.xlu0 %v1070
    %v1072 = vpop.xlane.xlu0 %1071
    %v1073 = vsel %vm758, %v1045, -inf
    %1074 = vmax.xlane.f32.xlu0 %v1073
    %v1075 = vpop.xlane.xlu0 %1074
    %v1076 = vsel %vm758, %v1046, -inf
    %1077 = vmax.xlane.f32.xlu0 %v1076
    %v1078 = vpop.xlane.xlu0 %1077
    %v1079 = vsel %vm758, %v1047, -inf
    %1080 = vmax.xlane.f32.xlu0 %v1079
    %v1081 = vpop.xlane.xlu0 %1080
    %v1082 = vsel %vm758, %v1048, -inf
    %1083 = vmax.xlane.f32.xlu0 %v1082
    %v1084 = vpop.xlane.xlu0 %1083
    %v1085 = vsel %vm758, %v1049, -inf
    %1086 = vmax.xlane.f32.xlu0 %v1085
    %v1087 = vpop.xlane.xlu0 %1086
    %v1088 = vsel %vm758, %v1050, -inf
    %1089 = vmax.xlane.f32.xlu0 %v1088
    %v1090 = vpop.xlane.xlu0 %1089
    %v1091 = vsel %vm758, %v1051, -inf
    %1092 = vmax.xlane.f32.xlu0 %v1091
    %v1093 = vpop.xlane.xlu0 %1092
    %v1094 = vsel %vm758, %v1052, -inf
    %1095 = vmax.xlane.f32.xlu0 %v1094
    %v1096 = vpop.xlane.xlu0 %1095
    %v1097 = vsel %vm758, %v1053, -inf
    %1098 = vmax.xlane.f32.xlu0 %v1097
    %v1099 = vpop.xlane.xlu0 %1098
    %v1100 = vsel %vm758, %v1054, -inf
    %1101 = vmax.xlane.f32.xlu0 %v1100
    %v1102 = vpop.xlane.xlu0 %1101
    %v1103 = vsub.f32 %v1039, %v1057
    %v1104 = vsub.f32 %v1040, %v1060
    %v1105 = vsub.f32 %v1041, %v1063
    %v1106 = vsub.f32 %v1042, %v1066
    %v1107 = vsub.f32 %v1043, %v1069
    %v1108 = vsub.f32 %v1044, %v1072
    %v1109 = vsub.f32 %v1045, %v1075
    %v1110 = vsub.f32 %v1046, %v1078
    %v1111 = vsub.f32 %v1047, %v1081
    %v1112 = vsub.f32 %v1048, %v1084
    %v1113 = vsub.f32 %v1049, %v1087
    %v1114 = vsub.f32 %v1050, %v1090
    %v1115 = vsub.f32 %v1051, %v1093
    %v1116 = vsub.f32 %v1052, %v1096
    %v1117 = vsub.f32 %v1053, %v1099
    %v1118 = vsub.f32 %v1054, %v1102
    %v1119 = vmul.f32 %v1103, 1.442695
    %v1120 = vpow.pop %v1119
    %v1121 = vmul.f32 %v1104, 1.442695
    %v1122 = vpow.pop %v1121
    %v1123 = vmul.f32 %v1105, 1.442695
    %v1124 = vpow.pop %v1123
    %v1125 = vmul.f32 %v1106, 1.442695
    %v1126 = vpow.pop %v1125
    %v1127 = vmul.f32 %v1107, 1.442695
    %v1128 = vpow.pop %v1127
    %v1129 = vmul.f32 %v1108, 1.442695
    %v1130 = vpow.pop %v1129
    %v1131 = vmul.f32 %v1109, 1.442695
    %v1132 = vpow.pop %v1131
    %v1133 = vmul.f32 %v1110, 1.442695
    %v1134 = vpow.pop %v1133
    %v1135 = vmul.f32 %v1111, 1.442695
    %v1136 = vpow.pop %v1135
    %v1137 = vmul.f32 %v1112, 1.442695
    %v1138 = vpow.pop %v1137
    %v1139 = vmul.f32 %v1113, 1.442695
    %v1140 = vpow.pop %v1139
    %v1141 = vmul.f32 %v1114, 1.442695
    %v1142 = vpow.pop %v1141
    %v1143 = vmul.f32 %v1115, 1.442695
    %v1144 = vpow.pop %v1143
    %v1145 = vmul.f32 %v1116, 1.442695
    %v1146 = vpow.pop %v1145
    %v1147 = vmul.f32 %v1117, 1.442695
    %v1148 = vpow.pop %v1147
    %v1149 = vmul.f32 %v1118, 1.442695
    %v1150 = vpow.pop %v1149
    %v1151 = vsel %vm758, %v1120, 0.0
    %1152 = vadd.xlane.f32.xlu0 %v1151
    %v1153 = vpop.xlane.xlu0 %1152
    %v1154 = vsel %vm758, %v1122, 0.0
    %1155 = vadd.xlane.f32.xlu0 %v1154
    %v1156 = vpop.xlane.xlu0 %1155
    %v1157 = vsel %vm758, %v1124, 0.0
    %1158 = vadd.xlane.f32.xlu0 %v1157
    %v1159 = vpop.xlane.xlu0 %1158
    %v1160 = vsel %vm758, %v1126, 0.0
    %1161 = vadd.xlane.f32.xlu0 %v1160
    %v1162 = vpop.xlane.xlu0 %1161
    %v1163 = vsel %vm758, %v1128, 0.0
    %1164 = vadd.xlane.f32.xlu0 %v1163
    %v1165 = vpop.xlane.xlu0 %1164
    %v1166 = vsel %vm758, %v1130, 0.0
    %1167 = vadd.xlane.f32.xlu0 %v1166
    %v1168 = vpop.xlane.xlu0 %1167
    %v1169 = vsel %vm758, %v1132, 0.0
    %1170 = vadd.xlane.f32.xlu0 %v1169
    %v1171 = vpop.xlane.xlu0 %1170
    %v1172 = vsel %vm758, %v1134, 0.0
    %1173 = vadd.xlane.f32.xlu0 %v1172
    %v1174 = vpop.xlane.xlu0 %1173
    %v1175 = vsel %vm758, %v1136, 0.0
    %1176 = vadd.xlane.f32.xlu0 %v1175
    %v1177 = vpop.xlane.xlu0 %1176
    %v1178 = vsel %vm758, %v1138, 0.0
    %1179 = vadd.xlane.f32.xlu0 %v1178
    %v1180 = vpop.xlane.xlu0 %1179
    %v1181 = vsel %vm758, %v1140, 0.0
    %1182 = vadd.xlane.f32.xlu0 %v1181
    %v1183 = vpop.xlane.xlu0 %1182
    %v1184 = vsel %vm758, %v1142, 0.0
    %1185 = vadd.xlane.f32.xlu0 %v1184
    %v1186 = vpop.xlane.xlu0 %1185
    %v1187 = vsel %vm758, %v1144, 0.0
    %1188 = vadd.xlane.f32.xlu0 %v1187
    %v1189 = vpop.xlane.xlu0 %1188
    %v1190 = vsel %vm758, %v1146, 0.0
    %1191 = vadd.xlane.f32.xlu0 %v1190
    %v1192 = vpop.xlane.xlu0 %1191
    %v1193 = vsel %vm758, %v1148, 0.0
    %1194 = vadd.xlane.f32.xlu0 %v1193
    %v1195 = vpop.xlane.xlu0 %1194
    %v1196 = vsel %vm758, %v1150, 0.0
    %1197 = vadd.xlane.f32.xlu0 %v1196
    %v1198 = vpop.xlane.xlu0 %1197
    %v1199 = vrcp.pop %v1153
    %v1200 = vmul.f32 %v1153, %v1199
    %v1201 = vsub.f32 1.0, %v1200
    %v1202 = vmul.f32 %v1199, %v1201
    %v1203 = vadd.f32 %v1199, %v1202
    %vm1204 = vweird.f32 %v1153
    %vm1205 = vweird.f32 %v1199
    %vm1206 = vmor %vm1204, %vm1205
    %v1207 = vsel %vm1206, %v1199, %v1203
    %v1208 = vand.u32 2147483647, %v1153
    %vm1209 = vcmp.eq.f32.partialorder %v1208, 8.507059e+37
    %v1210 = vand.u32 %v1153, 2147483648
    %v1211 = vor.u32 1.1754944e-38, %v1210
    %v1212 = vsel %vm1209, %v1211, %v1207
    %v1213 = vmul.f32 %v1120, %v1212
    %v1214 = vrcp.pop %v1156
    %v1215 = vmul.f32 %v1156, %v1214
    %v1216 = vsub.f32 1.0, %v1215
    %v1217 = vmul.f32 %v1214, %v1216
    %v1218 = vadd.f32 %v1214, %v1217
    %vm1219 = vweird.f32 %v1156
    %vm1220 = vweird.f32 %v1214
    %vm1221 = vmor %vm1219, %vm1220
    %v1222 = vsel %vm1221, %v1214, %v1218
    %v1223 = vand.u32 2147483647, %v1156
    %vm1224 = vcmp.eq.f32.partialorder %v1223, 8.507059e+37
    %v1225 = vand.u32 %v1156, 2147483648
    %v1226 = vor.u32 1.1754944e-38, %v1225
    %v1227 = vsel %vm1224, %v1226, %v1222
    %v1228 = vmul.f32 %v1122, %v1227
    %v1229 = vrcp.pop %v1159
    %v1230 = vmul.f32 %v1159, %v1229
    %v1231 = vsub.f32 1.0, %v1230
    %v1232 = vmul.f32 %v1229, %v1231
    %v1233 = vadd.f32 %v1229, %v1232
    %vm1234 = vweird.f32 %v1159
    %vm1235 = vweird.f32 %v1229
    %vm1236 = vmor %vm1234, %vm1235
    %v1237 = vsel %vm1236, %v1229, %v1233
    %v1238 = vand.u32 2147483647, %v1159
    %vm1239 = vcmp.eq.f32.partialorder %v1238, 8.507059e+37
    %v1240 = vand.u32 %v1159, 2147483648
    %v1241 = vor.u32 1.1754944e-38, %v1240
    %v1242 = vsel %vm1239, %v1241, %v1237
    %v1243 = vmul.f32 %v1124, %v1242
    %v1244 = vrcp.pop %v1162
    %v1245 = vmul.f32 %v1162, %v1244
    %v1246 = vsub.f32 1.0, %v1245
    %v1247 = vmul.f32 %v1244, %v1246
    %v1248 = vadd.f32 %v1244, %v1247
    %vm1249 = vweird.f32 %v1162
    %vm1250 = vweird.f32 %v1244
    %vm1251 = vmor %vm1249, %vm1250
    %v1252 = vsel %vm1251, %v1244, %v1248
    %v1253 = vand.u32 2147483647, %v1162
    %vm1254 = vcmp.eq.f32.partialorder %v1253, 8.507059e+37
    %v1255 = vand.u32 %v1162, 2147483648
    %v1256 = vor.u32 1.1754944e-38, %v1255
    %v1257 = vsel %vm1254, %v1256, %v1252
    %v1258 = vmul.f32 %v1126, %v1257
    %v1259 = vrcp.pop %v1165
    %v1260 = vmul.f32 %v1165, %v1259
    %v1261 = vsub.f32 1.0, %v1260
    %v1262 = vmul.f32 %v1259, %v1261
    %v1263 = vadd.f32 %v1259, %v1262
    %vm1264 = vweird.f32 %v1165
    %vm1265 = vweird.f32 %v1259
    %vm1266 = vmor %vm1264, %vm1265
    %v1267 = vsel %vm1266, %v1259, %v1263
    %v1268 = vand.u32 2147483647, %v1165
    %vm1269 = vcmp.eq.f32.partialorder %v1268, 8.507059e+37
    %v1270 = vand.u32 %v1165, 2147483648
    %v1271 = vor.u32 1.1754944e-38, %v1270
    %v1272 = vsel %vm1269, %v1271, %v1267
    %v1273 = vmul.f32 %v1128, %v1272
    %v1274 = vrcp.pop %v1168
    %v1275 = vmul.f32 %v1168, %v1274
    %v1276 = vsub.f32 1.0, %v1275
    %v1277 = vmul.f32 %v1274, %v1276
    %v1278 = vadd.f32 %v1274, %v1277
    %vm1279 = vweird.f32 %v1168
    %vm1280 = vweird.f32 %v1274
    %vm1281 = vmor %vm1279, %vm1280
    %v1282 = vsel %vm1281, %v1274, %v1278
    %v1283 = vand.u32 2147483647, %v1168
    %vm1284 = vcmp.eq.f32.partialorder %v1283, 8.507059e+37
    %v1285 = vand.u32 %v1168, 2147483648
    %v1286 = vor.u32 1.1754944e-38, %v1285
    %v1287 = vsel %vm1284, %v1286, %v1282
    %v1288 = vmul.f32 %v1130, %v1287
    %v1289 = vrcp.pop %v1171
    %v1290 = vmul.f32 %v1171, %v1289
    %v1291 = vsub.f32 1.0, %v1290
    %v1292 = vmul.f32 %v1289, %v1291
    %v1293 = vadd.f32 %v1289, %v1292
    %vm1294 = vweird.f32 %v1171
    %vm1295 = vweird.f32 %v1289
    %vm1296 = vmor %vm1294, %vm1295
    %v1297 = vsel %vm1296, %v1289, %v1293
    %v1298 = vand.u32 2147483647, %v1171
    %vm1299 = vcmp.eq.f32.partialorder %v1298, 8.507059e+37
    %v1300 = vand.u32 %v1171, 2147483648
    %v1301 = vor.u32 1.1754944e-38, %v1300
    %v1302 = vsel %vm1299, %v1301, %v1297
    %v1303 = vmul.f32 %v1132, %v1302
    %v1304 = vrcp.pop %v1174
    %v1305 = vmul.f32 %v1174, %v1304
    %v1306 = vsub.f32 1.0, %v1305
    %v1307 = vmul.f32 %v1304, %v1306
    %v1308 = vadd.f32 %v1304, %v1307
    %vm1309 = vweird.f32 %v1174
    %vm1310 = vweird.f32 %v1304
    %vm1311 = vmor %vm1309, %vm1310
    %v1312 = vsel %vm1311, %v1304, %v1308
    %v1313 = vand.u32 2147483647, %v1174
    %vm1314 = vcmp.eq.f32.partialorder %v1313, 8.507059e+37
    %v1315 = vand.u32 %v1174, 2147483648
    %v1316 = vor.u32 1.1754944e-38, %v1315
    %v1317 = vsel %vm1314, %v1316, %v1312
    %v1318 = vmul.f32 %v1134, %v1317
    %v1319 = vrcp.pop %v1177
    %v1320 = vmul.f32 %v1177, %v1319
    %v1321 = vsub.f32 1.0, %v1320
    %v1322 = vmul.f32 %v1319, %v1321
    %v1323 = vadd.f32 %v1319, %v1322
    %vm1324 = vweird.f32 %v1177
    %vm1325 = vweird.f32 %v1319
    %vm1326 = vmor %vm1324, %vm1325
    %v1327 = vsel %vm1326, %v1319, %v1323
    %v1328 = vand.u32 2147483647, %v1177
    %vm1329 = vcmp.eq.f32.partialorder %v1328, 8.507059e+37
    %v1330 = vand.u32 %v1177, 2147483648
    %v1331 = vor.u32 1.1754944e-38, %v1330
    %v1332 = vsel %vm1329, %v1331, %v1327
    %v1333 = vmul.f32 %v1136, %v1332
    %v1334 = vrcp.pop %v1180
    %v1335 = vmul.f32 %v1180, %v1334
    %v1336 = vsub.f32 1.0, %v1335
    %v1337 = vmul.f32 %v1334, %v1336
    %v1338 = vadd.f32 %v1334, %v1337
    %vm1339 = vweird.f32 %v1180
    %vm1340 = vweird.f32 %v1334
    %vm1341 = vmor %vm1339, %vm1340
    %v1342 = vsel %vm1341, %v1334, %v1338
    %v1343 = vand.u32 2147483647, %v1180
    %vm1344 = vcmp.eq.f32.partialorder %v1343, 8.507059e+37
    %v1345 = vand.u32 %v1180, 2147483648
    %v1346 = vor.u32 1.1754944e-38, %v1345
    %v1347 = vsel %vm1344, %v1346, %v1342
    %v1348 = vmul.f32 %v1138, %v1347
    %v1349 = vrcp.pop %v1183
    %v1350 = vmul.f32 %v1183, %v1349
    %v1351 = vsub.f32 1.0, %v1350
    %v1352 = vmul.f32 %v1349, %v1351
    %v1353 = vadd.f32 %v1349, %v1352
    %vm1354 = vweird.f32 %v1183
    %vm1355 = vweird.f32 %v1349
    %vm1356 = vmor %vm1354, %vm1355
    %v1357 = vsel %vm1356, %v1349, %v1353
    %v1358 = vand.u32 2147483647, %v1183
    %vm1359 = vcmp.eq.f32.partialorder %v1358, 8.507059e+37
    %v1360 = vand.u32 %v1183, 2147483648
    %v1361 = vor.u32 1.1754944e-38, %v1360
    %v1362 = vsel %vm1359, %v1361, %v1357
    %v1363 = vmul.f32 %v1140, %v1362
    %v1364 = vrcp.pop %v1186
    %v1365 = vmul.f32 %v1186, %v1364
    %v1366 = vsub.f32 1.0, %v1365
    %v1367 = vmul.f32 %v1364, %v1366
    %v1368 = vadd.f32 %v1364, %v1367
    %vm1369 = vweird.f32 %v1186
    %vm1370 = vweird.f32 %v1364
    %vm1371 = vmor %vm1369, %vm1370
    %v1372 = vsel %vm1371, %v1364, %v1368
    %v1373 = vand.u32 2147483647, %v1186
    %vm1374 = vcmp.eq.f32.partialorder %v1373, 8.507059e+37
    %v1375 = vand.u32 %v1186, 2147483648
    %v1376 = vor.u32 1.1754944e-38, %v1375
    %v1377 = vsel %vm1374, %v1376, %v1372
    %v1378 = vmul.f32 %v1142, %v1377
    %v1379 = vrcp.pop %v1189
    %v1380 = vmul.f32 %v1189, %v1379
    %v1381 = vsub.f32 1.0, %v1380
    %v1382 = vmul.f32 %v1379, %v1381
    %v1383 = vadd.f32 %v1379, %v1382
    %vm1384 = vweird.f32 %v1189
    %vm1385 = vweird.f32 %v1379
    %vm1386 = vmor %vm1384, %vm1385
    %v1387 = vsel %vm1386, %v1379, %v1383
    %v1388 = vand.u32 2147483647, %v1189
    %vm1389 = vcmp.eq.f32.partialorder %v1388, 8.507059e+37
    %v1390 = vand.u32 %v1189, 2147483648
    %v1391 = vor.u32 1.1754944e-38, %v1390
    %v1392 = vsel %vm1389, %v1391, %v1387
    %v1393 = vmul.f32 %v1144, %v1392
    %v1394 = vrcp.pop %v1192
    %v1395 = vmul.f32 %v1192, %v1394
    %v1396 = vsub.f32 1.0, %v1395
    %v1397 = vmul.f32 %v1394, %v1396
    %v1398 = vadd.f32 %v1394, %v1397
    %vm1399 = vweird.f32 %v1192
    %vm1400 = vweird.f32 %v1394
    %vm1401 = vmor %vm1399, %vm1400
    %v1402 = vsel %vm1401, %v1394, %v1398
    %v1403 = vand.u32 2147483647, %v1192
    %vm1404 = vcmp.eq.f32.partialorder %v1403, 8.507059e+37
    %v1405 = vand.u32 %v1192, 2147483648
    %v1406 = vor.u32 1.1754944e-38, %v1405
    %v1407 = vsel %vm1404, %v1406, %v1402
    %v1408 = vmul.f32 %v1146, %v1407
    %v1409 = vrcp.pop %v1195
    %v1410 = vmul.f32 %v1195, %v1409
    %v1411 = vsub.f32 1.0, %v1410
    %v1412 = vmul.f32 %v1409, %v1411
    %v1413 = vadd.f32 %v1409, %v1412
    %vm1414 = vweird.f32 %v1195
    %vm1415 = vweird.f32 %v1409
    %vm1416 = vmor %vm1414, %vm1415
    %v1417 = vsel %vm1416, %v1409, %v1413
    %v1418 = vand.u32 2147483647, %v1195
    %vm1419 = vcmp.eq.f32.partialorder %v1418, 8.507059e+37
    %v1420 = vand.u32 %v1195, 2147483648
    %v1421 = vor.u32 1.1754944e-38, %v1420
    %v1422 = vsel %vm1419, %v1421, %v1417
    %v1423 = vmul.f32 %v1148, %v1422
    %v1424 = vrcp.pop %v1198
    %v1425 = vmul.f32 %v1198, %v1424
    %v1426 = vsub.f32 1.0, %v1425
    %v1427 = vmul.f32 %v1424, %v1426
    %v1428 = vadd.f32 %v1424, %v1427
    %vm1429 = vweird.f32 %v1198
    %vm1430 = vweird.f32 %v1424
    %vm1431 = vmor %vm1429, %vm1430
    %v1432 = vsel %vm1431, %v1424, %v1428
    %v1433 = vand.u32 2147483647, %v1198
    %vm1434 = vcmp.eq.f32.partialorder %v1433, 8.507059e+37
    %v1435 = vand.u32 %v1198, 2147483648
    %v1436 = vor.u32 1.1754944e-38, %v1435
    %v1437 = vsel %vm1434, %v1436, %v1432
    %v1438 = vmul.f32 %v1150, %v1437
    %v1440 = vsel %vm758, %v1213, 0
    %v1443 = vsel %vm758, %v1228, 0
    %1445 = vmatpush.msra.mxu0 0.0
    %1446 = vmatpush.msra.mxu0 0.0
    %1447 = vmatpush.msra.mxu0 0.0
    %1448 = vmatpush.msra.mxu0 0.0
    %1449 = vmatpush.msra.mxu0 0.0
    %1450 = vmatpush.msra.mxu0 0.0
    %1451 = vmatpush.msra.mxu0 0.0
    %1452 = vmatpush.msra.mxu0 0.0
    %1453 = vmatpush.msra.mxu0 0.0
    %1454 = vmatpush.msra.mxu0 0.0
    %1455 = vmatpush.msra.mxu0 0.0
    %1456 = vmatpush.msra.mxu0 0.0
    %1457 = vmatpush.msra.mxu0 0.0
    %1458 = vmatpush.msra.mxu0 0.0
    %1459 = vmatpush.msra.mxu0 %v593
    %1460 = vmatpush.msra.mxu0 %v590
    %1461 = vmatmul.f32.gmra.mxu0 %v1440
    %v1462 = vpop.f32.mrf.mxu0
    %v1463 = vadd.f32 0.0, %v1462
    %1464 = vmatmul.f32.gmra.mxu0 %v1443
    %v1465 = vpop.f32.mrf.mxu0
    %v1466 = vadd.f32 0.0, %v1465
    %1467 = vdwg.mxu0
    %v1469 = vsel %vm758, %v1243, 0
    %v1472 = vsel %vm758, %v1258, 0
    %1474 = vmatpush.msra.mxu0 0.0
    %1475 = vmatpush.msra.mxu0 0.0
    %1476 = vmatpush.msra.mxu0 0.0
    %1477 = vmatpush.msra.mxu0 0.0
    %1478 = vmatpush.msra.mxu0 0.0
    %1479 = vmatpush.msra.mxu0 0.0
    %1480 = vmatpush.msra.mxu0 0.0
    %1481 = vmatpush.msra.mxu0 0.0
    %1482 = vmatpush.msra.mxu0 0.0
    %1483 = vmatpush.msra.mxu0 0.0
    %1484 = vmatpush.msra.mxu0 0.0
    %1485 = vmatpush.msra.mxu0 0.0
    %1486 = vmatpush.msra.mxu0 0.0
    %1487 = vmatpush.msra.mxu0 0.0
    %1488 = vmatpush.msra.mxu0 %v616
    %1489 = vmatpush.msra.mxu0 %v613
    %1490 = vmatmul.f32.gmra.mxu0 %v1469
    %v1491 = vpop.f32.mrf.mxu0
    %v1492 = vadd.f32 0.0, %v1491
    %1493 = vmatmul.f32.gmra.mxu0 %v1472
    %v1494 = vpop.f32.mrf.mxu0
    %v1495 = vadd.f32 0.0, %v1494
    %1496 = vdwg.mxu0
    %v1498 = vsel %vm758, %v1273, 0
    %v1501 = vsel %vm758, %v1288, 0
    %1503 = vmatpush.msra.mxu0 0.0
    %1504 = vmatpush.msra.mxu0 0.0
    %1505 = vmatpush.msra.mxu0 0.0
    %1506 = vmatpush.msra.mxu0 0.0
    %1507 = vmatpush.msra.mxu0 0.0
    %1508 = vmatpush.msra.mxu0 0.0
    %1509 = vmatpush.msra.mxu0 0.0
    %1510 = vmatpush.msra.mxu0 0.0
    %1511 = vmatpush.msra.mxu0 0.0
    %1512 = vmatpush.msra.mxu0 0.0
    %1513 = vmatpush.msra.mxu0 0.0
    %1514 = vmatpush.msra.mxu0 0.0
    %1515 = vmatpush.msra.mxu0 0.0
    %1516 = vmatpush.msra.mxu0 0.0
    %1517 = vmatpush.msra.mxu0 %v639
    %1518 = vmatpush.msra.mxu0 %v636
    %1519 = vmatmul.f32.gmra.mxu0 %v1498
    %v1520 = vpop.f32.mrf.mxu0
    %v1521 = vadd.f32 0.0, %v1520
    %1522 = vmatmul.f32.gmra.mxu0 %v1501
    %v1523 = vpop.f32.mrf.mxu0
    %v1524 = vadd.f32 0.0, %v1523
    %1525 = vdwg.mxu0
    %v1527 = vsel %vm758, %v1303, 0
    %v1530 = vsel %vm758, %v1318, 0
    %1532 = vmatpush.msra.mxu0 0.0
    %1533 = vmatpush.msra.mxu0 0.0
    %1534 = vmatpush.msra.mxu0 0.0
    %1535 = vmatpush.msra.mxu0 0.0
    %1536 = vmatpush.msra.mxu0 0.0
    %1537 = vmatpush.msra.mxu0 0.0
    %1538 = vmatpush.msra.mxu0 0.0
    %1539 = vmatpush.msra.mxu0 0.0
    %1540 = vmatpush.msra.mxu0 0.0
    %1541 = vmatpush.msra.mxu0 0.0
    %1542 = vmatpush.msra.mxu0 0.0
    %1543 = vmatpush.msra.mxu0 0.0
    %1544 = vmatpush.msra.mxu0 0.0
    %1545 = vmatpush.msra.mxu0 0.0
    %1546 = vmatpush.msra.mxu0 %v662
    %1547 = vmatpush.msra.mxu0 %v659
    %1548 = vmatmul.f32.gmra.mxu0 %v1527
    %v1549 = vpop.f32.mrf.mxu0
    %v1550 = vadd.f32 0.0, %v1549
    %1551 = vmatmul.f32.gmra.mxu0 %v1530
    %v1552 = vpop.f32.mrf.mxu0
    %v1553 = vadd.f32 0.0, %v1552
    %1554 = vdwg.mxu0
    %v1556 = vsel %vm758, %v1333, 0
    %v1559 = vsel %vm758, %v1348, 0
    %1561 = vmatpush.msra.mxu0 0.0
    %1562 = vmatpush.msra.mxu0 0.0
    %1563 = vmatpush.msra.mxu0 0.0
    %1564 = vmatpush.msra.mxu0 0.0
    %1565 = vmatpush.msra.mxu0 0.0
    %1566 = vmatpush.msra.mxu0 0.0
    %1567 = vmatpush.msra.mxu0 0.0
    %1568 = vmatpush.msra.mxu0 0.0
    %1569 = vmatpush.msra.mxu0 0.0
    %1570 = vmatpush.msra.mxu0 0.0
    %1571 = vmatpush.msra.mxu0 0.0
    %1572 = vmatpush.msra.mxu0 0.0
    %1573 = vmatpush.msra.mxu0 0.0
    %1574 = vmatpush.msra.mxu0 0.0
    %1575 = vmatpush.msra.mxu0 %v685
    %1576 = vmatpush.msra.mxu0 %v682
    %1577 = vmatmul.f32.gmra.mxu0 %v1556
    %v1578 = vpop.f32.mrf.mxu0
    %v1579 = vadd.f32 0.0, %v1578
    %1580 = vmatmul.f32.gmra.mxu0 %v1559
    %v1581 = vpop.f32.mrf.mxu0
    %v1582 = vadd.f32 0.0, %v1581
    %1583 = vdwg.mxu0
    %v1585 = vsel %vm758, %v1363, 0
    %v1588 = vsel %vm758, %v1378, 0
    %1590 = vmatpush.msra.mxu0 0.0
    %1591 = vmatpush.msra.mxu0 0.0
    %1592 = vmatpush.msra.mxu0 0.0
    %1593 = vmatpush.msra.mxu0 0.0
    %1594 = vmatpush.msra.mxu0 0.0
    %1595 = vmatpush.msra.mxu0 0.0
    %1596 = vmatpush.msra.mxu0 0.0
    %1597 = vmatpush.msra.mxu0 0.0
    %1598 = vmatpush.msra.mxu0 0.0
    %1599 = vmatpush.msra.mxu0 0.0
    %1600 = vmatpush.msra.mxu0 0.0
    %1601 = vmatpush.msra.mxu0 0.0
    %1602 = vmatpush.msra.mxu0 0.0
    %1603 = vmatpush.msra.mxu0 0.0
    %1604 = vmatpush.msra.mxu0 %v708
    %1605 = vmatpush.msra.mxu0 %v705
    %1606 = vmatmul.f32.gmra.mxu0 %v1585
    %v1607 = vpop.f32.mrf.mxu0
    %v1608 = vadd.f32 0.0, %v1607
    %1609 = vmatmul.f32.gmra.mxu0 %v1588
    %v1610 = vpop.f32.mrf.mxu0
    %v1611 = vadd.f32 0.0, %v1610
    %1612 = vdwg.mxu0
    %v1614 = vsel %vm758, %v1393, 0
    %v1617 = vsel %vm758, %v1408, 0
    %1619 = vmatpush.msra.mxu0 0.0
    %1620 = vmatpush.msra.mxu0 0.0
    %1621 = vmatpush.msra.mxu0 0.0
    %1622 = vmatpush.msra.mxu0 0.0
    %1623 = vmatpush.msra.mxu0 0.0
    %1624 = vmatpush.msra.mxu0 0.0
    %1625 = vmatpush.msra.mxu0 0.0
    %1626 = vmatpush.msra.mxu0 0.0
    %1627 = vmatpush.msra.mxu0 0.0
    %1628 = vmatpush.msra.mxu0 0.0
    %1629 = vmatpush.msra.mxu0 0.0
    %1630 = vmatpush.msra.mxu0 0.0
    %1631 = vmatpush.msra.mxu0 0.0
    %1632 = vmatpush.msra.mxu0 0.0
    %1633 = vmatpush.msra.mxu0 %v731
    %1634 = vmatpush.msra.mxu0 %v728
    %1635 = vmatmul.f32.gmra.mxu0 %v1614
    %v1636 = vpop.f32.mrf.mxu0
    %v1637 = vadd.f32 0.0, %v1636
    %1638 = vmatmul.f32.gmra.mxu0 %v1617
    %v1639 = vpop.f32.mrf.mxu0
    %v1640 = vadd.f32 0.0, %v1639
    %1641 = vdwg.mxu0
    %v1643 = vsel %vm758, %v1423, 0
    %v1646 = vsel %vm758, %v1438, 0
    %1648 = vmatpush.msra.mxu0 0.0
    %1649 = vmatpush.msra.mxu0 0.0
    %1650 = vmatpush.msra.mxu0 0.0
    %1651 = vmatpush.msra.mxu0 0.0
    %1652 = vmatpush.msra.mxu0 0.0
    %1653 = vmatpush.msra.mxu0 0.0
    %1654 = vmatpush.msra.mxu0 0.0
    %1655 = vmatpush.msra.mxu0 0.0
    %1656 = vmatpush.msra.mxu0 0.0
    %1657 = vmatpush.msra.mxu0 0.0
    %1658 = vmatpush.msra.mxu0 0.0
    %1659 = vmatpush.msra.mxu0 0.0
    %1660 = vmatpush.msra.mxu0 0.0
    %1661 = vmatpush.msra.mxu0 0.0
    %1662 = vmatpush.msra.mxu0 %v754
    %1663 = vmatpush.msra.mxu0 %v751
    %1664 = vmatmul.f32.gmra.mxu0 %v1643
    %v1665 = vpop.f32.mrf.mxu0
    %v1666 = vadd.f32 0.0, %v1665
    %1667 = vmatmul.f32.gmra.mxu0 %v1646
    %v1668 = vpop.f32.mrf.mxu0
    %v1669 = vadd.f32 0.0, %v1668
    %1670 = vdwg.mxu0
    %v1671 = vld [vmem:[%s6] sm:$0xff]
    %v1672 = vld [vmem:[%s6 + $0x8] sm:$0xff]
    %v1673 = vld [vmem:[%s6 + $0x10] sm:$0xff]
    %v1674 = vld [vmem:[%s6 + $0x18] sm:$0xff]
    %v1675 = vld [vmem:[%s6 + $0x20] sm:$0xff]
    %v1676 = vld [vmem:[%s6 + $0x28] sm:$0xff]
    %v1677 = vld [vmem:[%s6 + $0x30] sm:$0xff]
    %v1678 = vld [vmem:[%s6 + $0x38] sm:$0xff]
    %v1679 = vld [vmem:[%s6 + $0x40] sm:$0xff]
    %v1680 = vld [vmem:[%s6 + $0x48] sm:$0xff]
    %v1681 = vld [vmem:[%s6 + $0x50] sm:$0xff]
    %v1682 = vld [vmem:[%s6 + $0x58] sm:$0xff]
    %v1683 = vld [vmem:[%s6 + $0x60] sm:$0xff]
    %v1684 = vld [vmem:[%s6 + $0x68] sm:$0xff]
    %v1685 = vld [vmem:[%s6 + $0x70] sm:$0xff]
    %v1686 = vld [vmem:[%s6 + $0x78] sm:$0xff]
    %v1688 = vsel %vm758, %v1463, 0
    %v1691 = vsel %vm758, %v1466, 0
    %1693 = vmatpush.msra.mxu0 0.0
    %1694 = vmatpush.msra.mxu0 0.0
    %1695 = vmatpush.msra.mxu0 0.0
    %1696 = vmatpush.msra.mxu0 0.0
    %1697 = vmatpush.msra.mxu0 0.0
    %1698 = vmatpush.msra.mxu0 0.0
    %1699 = vmatpush.msra.mxu0 0.0
    %1700 = vmatpush.msra.mxu0 0.0
    %1701 = vmatpush.msra.mxu0 0.0
    %1702 = vmatpush.msra.mxu0 0.0
    %1703 = vmatpush.msra.mxu0 0.0
    %1704 = vmatpush.msra.mxu0 0.0
    %1705 = vmatpush.msra.mxu0 0.0
    %1706 = vmatpush.msra.mxu0 0.0
    %1707 = vmatpush.msra.mxu0 %v1672
    %1708 = vmatpush.msra.mxu0 %v1671
    %1709 = vmatmul.f32.gmra.mxu0 %v1688
    %v1710 = vpop.f32.mrf.mxu0
    %v1711 = vadd.f32 0.0, %v1710
    %1712 = vmatmul.f32.gmra.mxu0 %v1691
    %v1713 = vpop.f32.mrf.mxu0
    %v1714 = vadd.f32 0.0, %v1713
    %1715 = vdwg.mxu0
    %v1717 = vsel %vm758, %v1492, 0
    %v1720 = vsel %vm758, %v1495, 0
    %1722 = vmatpush.msra.mxu0 0.0
    %1723 = vmatpush.msra.mxu0 0.0
    %1724 = vmatpush.msra.mxu0 0.0
    %1725 = vmatpush.msra.mxu0 0.0
    %1726 = vmatpush.msra.mxu0 0.0
    %1727 = vmatpush.msra.mxu0 0.0
    %1728 = vmatpush.msra.mxu0 0.0
    %1729 = vmatpush.msra.mxu0 0.0
    %1730 = vmatpush.msra.mxu0 0.0
    %1731 = vmatpush.msra.mxu0 0.0
    %1732 = vmatpush.msra.mxu0 0.0
    %1733 = vmatpush.msra.mxu0 0.0
    %1734 = vmatpush.msra.mxu0 0.0
    %1735 = vmatpush.msra.mxu0 0.0
    %1736 = vmatpush.msra.mxu0 %v1674
    %1737 = vmatpush.msra.mxu0 %v1673
    %1738 = vmatmul.f32.gmra.mxu0 %v1717
    %v1739 = vpop.f32.mrf.mxu0
    %v1740 = vadd.f32 0.0, %v1739
    %1741 = vmatmul.f32.gmra.mxu0 %v1720
    %v1742 = vpop.f32.mrf.mxu0
    %v1743 = vadd.f32 0.0, %v1742
    %1744 = vdwg.mxu0
    %v1746 = vsel %vm758, %v1521, 0
    %v1749 = vsel %vm758, %v1524, 0
    %1751 = vmatpush.msra.mxu0 0.0
    %1752 = vmatpush.msra.mxu0 0.0
    %1753 = vmatpush.msra.mxu0 0.0
    %1754 = vmatpush.msra.mxu0 0.0
    %1755 = vmatpush.msra.mxu0 0.0
    %1756 = vmatpush.msra.mxu0 0.0
    %1757 = vmatpush.msra.mxu0 0.0
    %1758 = vmatpush.msra.mxu0 0.0
    %1759 = vmatpush.msra.mxu0 0.0
    %1760 = vmatpush.msra.mxu0 0.0
    %1761 = vmatpush.msra.mxu0 0.0
    %1762 = vmatpush.msra.mxu0 0.0
    %1763 = vmatpush.msra.mxu0 0.0
    %1764 = vmatpush.msra.mxu0 0.0
    %1765 = vmatpush.msra.mxu0 %v1676
    %1766 = vmatpush.msra.mxu0 %v1675
    %1767 = vmatmul.f32.gmra.mxu0 %v1746
    %v1768 = vpop.f32.mrf.mxu0
    %v1769 = vadd.f32 0.0, %v1768
    %1770 = vmatmul.f32.gmra.mxu0 %v1749
    %v1771 = vpop.f32.mrf.mxu0
    %v1772 = vadd.f32 0.0, %v1771
    %1773 = vdwg.mxu0
    %v1775 = vsel %vm758, %v1550, 0
    %v1778 = vsel %vm758, %v1553, 0
    %1780 = vmatpush.msra.mxu0 0.0
    %1781 = vmatpush.msra.mxu0 0.0
    %1782 = vmatpush.msra.mxu0 0.0
    %1783 = vmatpush.msra.mxu0 0.0
    %1784 = vmatpush.msra.mxu0 0.0
    %1785 = vmatpush.msra.mxu0 0.0
    %1786 = vmatpush.msra.mxu0 0.0
    %1787 = vmatpush.msra.mxu0 0.0
    %1788 = vmatpush.msra.mxu0 0.0
    %1789 = vmatpush.msra.mxu0 0.0
    %1790 = vmatpush.msra.mxu0 0.0
    %1791 = vmatpush.msra.mxu0 0.0
    %1792 = vmatpush.msra.mxu0 0.0
    %1793 = vmatpush.msra.mxu0 0.0
    %1794 = vmatpush.msra.mxu0 %v1678
    %1795 = vmatpush.msra.mxu0 %v1677
    %1796 = vmatmul.f32.gmra.mxu0 %v1775
    %v1797 = vpop.f32.mrf.mxu0
    %v1798 = vadd.f32 0.0, %v1797
    %1799 = vmatmul.f32.gmra.mxu0 %v1778
    %v1800 = vpop.f32.mrf.mxu0
    %v1801 = vadd.f32 0.0, %v1800
    %1802 = vdwg.mxu0
    %v1804 = vsel %vm758, %v1579, 0
    %v1807 = vsel %vm758, %v1582, 0
    %1809 = vmatpush.msra.mxu0 0.0
    %1810 = vmatpush.msra.mxu0 0.0
    %1811 = vmatpush.msra.mxu0 0.0
    %1812 = vmatpush.msra.mxu0 0.0
    %1813 = vmatpush.msra.mxu0 0.0
    %1814 = vmatpush.msra.mxu0 0.0
    %1815 = vmatpush.msra.mxu0 0.0
    %1816 = vmatpush.msra.mxu0 0.0
    %1817 = vmatpush.msra.mxu0 0.0
    %1818 = vmatpush.msra.mxu0 0.0
    %1819 = vmatpush.msra.mxu0 0.0
    %1820 = vmatpush.msra.mxu0 0.0
    %1821 = vmatpush.msra.mxu0 0.0
    %1822 = vmatpush.msra.mxu0 0.0
    %1823 = vmatpush.msra.mxu0 %v1680
    %1824 = vmatpush.msra.mxu0 %v1679
    %1825 = vmatmul.f32.gmra.mxu0 %v1804
    %v1826 = vpop.f32.mrf.mxu0
    %v1827 = vadd.f32 0.0, %v1826
    %1828 = vmatmul.f32.gmra.mxu0 %v1807
    %v1829 = vpop.f32.mrf.mxu0
    %v1830 = vadd.f32 0.0, %v1829
    %1831 = vdwg.mxu0
    %v1833 = vsel %vm758, %v1608, 0
    %v1836 = vsel %vm758, %v1611, 0
    %1838 = vmatpush.msra.mxu0 0.0
    %1839 = vmatpush.msra.mxu0 0.0
    %1840 = vmatpush.msra.mxu0 0.0
    %1841 = vmatpush.msra.mxu0 0.0
    %1842 = vmatpush.msra.mxu0 0.0
    %1843 = vmatpush.msra.mxu0 0.0
    %1844 = vmatpush.msra.mxu0 0.0
    %1845 = vmatpush.msra.mxu0 0.0
    %1846 = vmatpush.msra.mxu0 0.0
    %1847 = vmatpush.msra.mxu0 0.0
    %1848 = vmatpush.msra.mxu0 0.0
    %1849 = vmatpush.msra.mxu0 0.0
    %1850 = vmatpush.msra.mxu0 0.0
    %1851 = vmatpush.msra.mxu0 0.0
    %1852 = vmatpush.msra.mxu0 %v1682
    %1853 = vmatpush.msra.mxu0 %v1681
    %1854 = vmatmul.f32.gmra.mxu0 %v1833
    %v1855 = vpop.f32.mrf.mxu0
    %v1856 = vadd.f32 0.0, %v1855
    %1857 = vmatmul.f32.gmra.mxu0 %v1836
    %v1858 = vpop.f32.mrf.mxu0
    %v1859 = vadd.f32 0.0, %v1858
    %1860 = vdwg.mxu0
    %v1862 = vsel %vm758, %v1637, 0
    %v1865 = vsel %vm758, %v1640, 0
    %1867 = vmatpush.msra.mxu0 0.0
    %1868 = vmatpush.msra.mxu0 0.0
    %1869 = vmatpush.msra.mxu0 0.0
    %1870 = vmatpush.msra.mxu0 0.0
    %1871 = vmatpush.msra.mxu0 0.0
    %1872 = vmatpush.msra.mxu0 0.0
    %1873 = vmatpush.msra.mxu0 0.0
    %1874 = vmatpush.msra.mxu0 0.0
    %1875 = vmatpush.msra.mxu0 0.0
    %1876 = vmatpush.msra.mxu0 0.0
    %1877 = vmatpush.msra.mxu0 0.0
    %1878 = vmatpush.msra.mxu0 0.0
    %1879 = vmatpush.msra.mxu0 0.0
    %1880 = vmatpush.msra.mxu0 0.0
    %1881 = vmatpush.msra.mxu0 %v1684
    %1882 = vmatpush.msra.mxu0 %v1683
    %1883 = vmatmul.f32.gmra.mxu0 %v1862
    %v1884 = vpop.f32.mrf.mxu0
    %v1885 = vadd.f32 0.0, %v1884
    %1886 = vmatmul.f32.gmra.mxu0 %v1865
    %v1887 = vpop.f32.mrf.mxu0
    %v1888 = vadd.f32 0.0, %v1887
    %1889 = vdwg.mxu0
    %v1891 = vsel %vm758, %v1666, 0
    %v1894 = vsel %vm758, %v1669, 0
    %1896 = vmatpush.msra.mxu0 0.0
    %1897 = vmatpush.msra.mxu0 0.0
    %1898 = vmatpush.msra.mxu0 0.0
    %1899 = vmatpush.msra.mxu0 0.0
    %1900 = vmatpush.msra.mxu0 0.0
    %1901 = vmatpush.msra.mxu0 0.0
    %1902 = vmatpush.msra.mxu0 0.0
    %1903 = vmatpush.msra.mxu0 0.0
    %1904 = vmatpush.msra.mxu0 0.0
    %1905 = vmatpush.msra.mxu0 0.0
    %1906 = vmatpush.msra.mxu0 0.0
    %1907 = vmatpush.msra.mxu0 0.0
    %1908 = vmatpush.msra.mxu0 0.0
    %1909 = vmatpush.msra.mxu0 0.0
    %1910 = vmatpush.msra.mxu0 %v1686
    %1911 = vmatpush.msra.mxu0 %v1685
    %1912 = vmatmul.f32.gmra.mxu0 %v1891
    %v1913 = vpop.f32.mrf.mxu0
    %v1914 = vadd.f32 0.0, %v1913
    %1915 = vmatmul.f32.gmra.mxu0 %v1894
    %v1916 = vpop.f32.mrf.mxu0
    %v1917 = vadd.f32 0.0, %v1916
    %1918 = vdwg.mxu0
    %v1919 = vsel %vm38, %v1711, 0.0
    %v1920 = vsel %vm38, %v1740, 0.0
    %v1921 = vadd.f32 %v1919, %v1920
    %v1922 = vsel %vm38, %v1769, 0.0
    %v1923 = vadd.f32 %v1921, %v1922
    %v1924 = vsel %vm38, %v1798, 0.0
    %v1925 = vadd.f32 %v1923, %v1924
    %v1926 = vsel %vm38, %v1827, 0.0
    %v1927 = vadd.f32 %v1925, %v1926
    %v1928 = vsel %vm38, %v1856, 0.0
    %v1929 = vadd.f32 %v1927, %v1928
    %v1930 = vsel %vm38, %v1885, 0.0
    %v1931 = vadd.f32 %v1929, %v1930
    %v1932 = vsel %vm38, %v1914, 0.0
    %v1933 = vadd.f32 %v1931, %v1932
    %v1934 = vsel %vm38, %v1714, 0.0
    %v1935 = vsel %vm38, %v1743, 0.0
    %v1936 = vadd.f32 %v1934, %v1935
    %v1937 = vsel %vm38, %v1772, 0.0
    %v1938 = vadd.f32 %v1936, %v1937
    %v1939 = vsel %vm38, %v1801, 0.0
    %v1940 = vadd.f32 %v1938, %v1939
    %v1941 = vsel %vm38, %v1830, 0.0
    %v1942 = vadd.f32 %v1940, %v1941
    %v1943 = vsel %vm38, %v1859, 0.0
    %v1944 = vadd.f32 %v1942, %v1943
    %v1945 = vsel %vm38, %v1888, 0.0
    %v1946 = vadd.f32 %v1944, %v1945
    %v1947 = vsel %vm38, %v1917, 0.0
    %v1948 = vadd.f32 %v1946, %v1947
    %v1949 = vld [vmem:[%s7] sm:$0x1]
    %v1951 = vperm.slane %v1949, 0
    %v1953 = vadd.f32 %v1933, %v1951
    %v1954 = vadd.f32 %v1948, %v1951
    %v1955 = vld [vmem:[%s8] sm:$0xff]
    %v1956 = vld [vmem:[%s8 + $0x8] sm:$0xff]
    %v1957 = vld [vmem:[%s8 + $0x10] sm:$0xff]
    %v1958 = vld [vmem:[%s8 + $0x18] sm:$0xff]
    %v1960 = vsel %vm38, %v1953, 0
    %v1963 = vsel %vm38, %v1954, 0
    %1965 = vmatpush.msra.mxu0 0.0
    %1966 = vmatpush.msra.mxu0 0.0
    %1967 = vmatpush.msra.mxu0 0.0
    %1968 = vmatpush.msra.mxu0 0.0
    %1969 = vmatpush.msra.mxu0 0.0
    %1970 = vmatpush.msra.mxu0 0.0
    %1971 = vmatpush.msra.mxu0 0.0
    %1972 = vmatpush.msra.mxu0 0.0
    %1973 = vmatpush.msra.mxu0 0.0
    %1974 = vmatpush.msra.mxu0 0.0
    %1975 = vmatpush.msra.mxu0 0.0
    %1976 = vmatpush.msra.mxu0 0.0
    %1977 = vmatpush.msra.mxu0 %v1958
    %1978 = vmatpush.msra.mxu0 %v1957
    %1979 = vmatpush.msra.mxu0 %v1956
    %1980 = vmatpush.msra.mxu0 %v1955
    %1981 = vmatmul.f32.gmra.mxu0 %v1960
    %v1982 = vpop.f32.mrf.mxu0
    %v1983 = vadd.f32 0.0, %v1982
    %1984 = vmatmul.f32.gmra.mxu0 %v1963
    %v1985 = vpop.f32.mrf.mxu0
    %v1986 = vadd.f32 0.0, %v1985
    %1987 = vdwg.mxu0
    %v1988 = vtanh.pop %v1983
    %v1989 = vtanh.pop %v1986
    %1992 = vrot.lane.b32.xlu0 %v1988, 96
    %v1993 = vpop.permute.xlu0 %1992
    %1994 = vrot.lane.b32.xlu0 %v1989, 96
    %v1995 = vpop.permute.xlu0 %1994
    %v1998 = vmul.f32 %v1983, %v1993
    %v1999 = vmul.f32 %v1986, %v1995
    %v2000 = vadd.f32 %v1953, %v1998
    %v2001 = vadd.f32 %v1954, %v1999
    %2002 = vst.msk [vmem:[#allocation2] sm:$0xff] %vm38, %v2000
    %2003 = vst.msk [vmem:[#allocation2 + $0x8] sm:$0xff] %vm38, %v2001
    // Predicated region
    $region42: #{tpu_custom_call.1} parent=1 // pred_check
      _
    $region43: #{tpu_custom_call.1} parent=1 // pred_check_branch
      %2005 = sbr.rel (0) target = $region45
    $region44: #{tpu_custom_call.1} parent=1 // pred_region
      %2007 = vsyncadd [#allocation3], 0
      %s2008 = sshll.u32 [#allocation2], 4
      %s2009 = int_to_ptr.vmem [resolvable:$true] %s2008
      %s2010 = sshll.u32 %s10, 4
      %s2011 = int_to_ptr.hbm [resolvable:$true] %s2010
      %2016 = dma.vmem_to_hbm [thread:$0]  %s2009, 256, %s2011, [#allocation3], 128, 128, 8
    $region45: #{tpu_custom_call.1} parent=1 // pred_fallthru
      _
    // Predicated region
    $region46: #{tpu_custom_call.1} parent=1 // pred_check
      _
    $region47: #{tpu_custom_call.1} parent=1 // pred_check_branch
      %2018 = sbr.rel (0) target = $region49
    $region48: #{tpu_custom_call.1} parent=1 // pred_region
      %2020 = dma.done [#allocation3], 256
    $region49: #{tpu_custom_call.1} parent=1 // pred_fallthru
      _
    %2021 = vsyncpa [#allocation3], 1

</llo_original>
